<compile_context>
chip_gen: v7x
topology: tpu7x:2x2x1
jax: 0.10.0
libtpu: 0.0.40
codegen_flags: <defaults>
</compile_context>

<pallas_src>
import math
from functools import partial

import jax
import jax.numpy as jnp
from jax import lax
from jax.experimental import pallas as pl
from jax.experimental.pallas import tpu as pltpu

LN_EPS = 1e-5  # nn.LayerNorm default


def _layernorm(x, gamma, beta):
    mu = jnp.mean(x, axis=-1, keepdims=True)
    var = jnp.mean((x - mu) ** 2, axis=-1, keepdims=True)
    return (x - mu) * lax.rsqrt(var + LN_EPS) * gamma + beta


def _gelu_tanh(x):
    # TODO(synk): PyTorch nn.GELU defaults to the exact erf form; the tanh
    # approximation is used because erf has no guaranteed Mosaic lowering.
    c = math.sqrt(2.0 / math.pi)
    return 0.5 * x * (1.0 + jnp.tanh(c * (x + 0.044715 * x * x * x)))


def _raw_reshape_cn_to_nc(sg, sg_scr, n, c):
    """Reinterpret a (C, N) row-major value as (N, C) (torch .reshape semantics)."""
    if c % n == 0:
        k = c // n
        sg_scr[...] = sg
        # Row i of the (N, C) view is the concatenation of sg rows i*k .. i*k+k-1,
        # i.e. a lane-concat of k sublane-strided reads from the VMEM scratch.
        return jnp.concatenate(
            [sg_scr[pl.ds(j, n, stride=k), :] for j in range(k)], axis=-1)
    # TODO(synk): general C/N ratios would need an in-kernel reshape that Mosaic
    # may reject; only the C % N == 0 case (exercised here) uses the safe path.
    return sg.reshape(n, c)


# ----------------------- fused TransBlock kernel -----------------------
def fused_kernel(x_ref, g1_ref, b1_ref, adj_ref, para_ref, wkv_ref,
                 g2_ref, b2_ref, w1_ref, fb1_ref, w2_ref, fb2_ref,
                 o_ref, sg_scr, *, num_heads, scale):
    f32 = jnp.float32
    bf16 = jnp.bfloat16

    x = x_ref[0]                                        # (N, C) f32
    N, C = x.shape
    hd = C // num_heads

    # ---------------- norm1 ----------------
    xn = _layernorm(x, g1_ref[...], b1_ref[...])        # (N, C) f32

    # ---------------- S_GCN ----------------
    ca = jnp.mean(xn, axis=1, keepdims=True)            # (N, 1)
    diff = jnp.transpose(ca) - ca                       # (N, N); [i, j] = ca[j] - ca[i]
    cs = jnp.abs(jnp.abs(jax.nn.sigmoid(diff) - 0.5) - 0.5) * 2.0
    # NOTE: cs is symmetric by construction, so the module's (cs.T + cs)/2 is a
    # mathematical no-op and is skipped here (saves an (N,N) transpose + add).
    w = adj_ref[...] * cs                               # (N, N) f32

    # sg[c, n] = sum_m xn[m, c] * w[m, n]  -- contract xn's row axis directly
    # (transposed-LHS dot_general; no explicit xn.T materialization).
    sg = lax.dot_general(xn.astype(bf16), w.astype(bf16),
                         dimension_numbers=(((0,), (0,)), ((), ())),
                         preferred_element_type=f32)    # (C, N)
    sg = jnp.maximum(sg * para_ref[...], 0.0)           # * para, ReLU   (C, N)

    # Raw (C, N) -> (N, C) memory reinterpretation, exactly like the PyTorch
    # `.reshape(B, N, heads, C//heads)` of the contiguous NCHW S_GCN output.
    q = _raw_reshape_cn_to_nc(sg, sg_scr, N, C)         # (N, C) f32

    # ---------------- attention ----------------
    kv = jnp.dot(xn.astype(bf16), wkv_ref[...].astype(bf16),
                 preferred_element_type=f32)            # (N, 2C)

    # TODO(synk): at hd=8 / N=16 a batched-over-heads dot_general would require
    # (N,C)->(heads,N,hd) relayouts that cost more than the 4 tiny matmuls they
    # replace; keep the static per-head loop (unrolled at trace time).
    head_outs = []
    for h in range(num_heads):
        lo, hi = h * hd, (h + 1) * hd
        q_h = q[:, lo:hi].astype(bf16)                  # (N, hd)
        k_h = kv[:, lo:hi].astype(bf16)                 # (N, hd)
        v_h = kv[:, C + lo:C + hi].astype(bf16)         # (N, hd)
        # s = q_h @ k_h^T without an explicit transpose (contract last dims).
        s = lax.dot_general(q_h, k_h, (((1,), (1,)), ((), ())),
                            preferred_element_type=f32) * scale     # (N, N)
        s = s - jnp.max(s, axis=-1, keepdims=True)
        p = jnp.exp(s)
        p = p * pl.reciprocal(jnp.sum(p, axis=-1, keepdims=True), approx=True)
        head_outs.append(jnp.dot(p.astype(bf16), v_h,
                                 preferred_element_type=f32))        # (N, hd)
    x1 = x + jnp.concatenate(head_outs, axis=-1)        # residual, gamma_1 == 1.0

    # ---------------- norm2 + MLP ----------------
    xn2 = _layernorm(x1, g2_ref[...], b2_ref[...])
    hmid = jnp.dot(xn2.astype(bf16), w1_ref[...].astype(bf16),
                   preferred_element_type=f32) + fb1_ref[...]
    hmid = _gelu_tanh(hmid)
    y = jnp.dot(hmid.astype(bf16), w2_ref[...].astype(bf16),
                preferred_element_type=f32) + fb2_ref[...]
    o_ref[0] = x1 + y                                   # residual, gamma_2 == 1.0


def trans_block(x, params, *, num_heads):
    B, N, C = x.shape
    hd = C // num_heads
    hidden = params["w1"].shape[1]
    scale = (1 + 1e-6) / (math.sqrt(hd) + 1e-6)
    f32 = jnp.float32
    const2 = lambda b: (0, 0)

    return pl.pallas_call(
        partial(fused_kernel, num_heads=num_heads, scale=scale),
        out_shape=jax.ShapeDtypeStruct((B, N, C), f32),
        grid=(B,),
        in_specs=[
            pl.BlockSpec((1, N, C), lambda b: (b, 0, 0)),   # x
            pl.BlockSpec((1, C), const2),                   # ln1 gamma
            pl.BlockSpec((1, C), const2),                   # ln1 beta
            pl.BlockSpec((N, N), const2),                   # adj
            pl.BlockSpec((C, N), const2),                   # para (stored (C, N))
            pl.BlockSpec((C, 2 * C), const2),               # w_kv
            pl.BlockSpec((1, C), const2),                   # ln2 gamma
            pl.BlockSpec((1, C), const2),                   # ln2 beta
            pl.BlockSpec((C, hidden), const2),              # w1
            pl.BlockSpec((1, hidden), const2),              # b1
            pl.BlockSpec((hidden, C), const2),              # w2
            pl.BlockSpec((1, C), const2),                   # b2
        ],
        out_specs=pl.BlockSpec((1, N, C), lambda b: (b, 0, 0)),
        scratch_shapes=[pltpu.VMEM((C, N), f32)],           # S_GCN output buffer
        compiler_params=pltpu.CompilerParams(
            dimension_semantics=("parallel",),
            vmem_limit_bytes=32 * 1024 * 1024),
    )(x, params["ln1_g"], params["ln1_b"], params["adj"], params["para_cn"],
      params["w_kv"], params["ln2_g"], params["ln2_b"],
      params["w1"], params["b1"], params["w2"], params["b2"])


# ---------------- pure-JAX reference (for correctness check) ----------------
def reference(x, params, num_heads):
    B, N, C = x.shape
    hd = C // num_heads
    scale = (1 + 1e-6) / (math.sqrt(hd) + 1e-6)

    xn = _layernorm(x, params["ln1_g"], params["ln1_b"])           # (B,N,C)
    fea = jnp.transpose(xn, (0, 2, 1))                             # (B,C,N)
    ca = jnp.mean(fea, axis=1)                                     # (B,N)
    diff = ca[:, None, :] - ca[:, :, None]                         # (B,N,N)
    cs = jnp.abs(jnp.abs(jax.nn.sigmoid(diff) - 0.5) - 0.5) * 2.0
    cs = (jnp.transpose(cs, (0, 2, 1)) + cs) * 0.5                 # (no-op, as in module)
    w = params["adj"][None] * cs
    sg = jnp.maximum(jnp.einsum("bcn,bnm->bcm", fea, w) * params["para_cn"][None], 0.0)
    q = sg.reshape(B, N, C)                                        # raw reinterpretation
    kv = xn @ params["w_kv"]                                       # (B,N,2C)
    qh = q.reshape(B, N, num_heads, hd).transpose(0, 2, 1, 3)
    kh = kv[..., :C].reshape(B, N, num_heads, hd).transpose(0, 2, 1, 3)
    vh = kv[..., C:].reshape(B, N, num_heads, hd).transpose(0, 2, 1, 3)
    attn = jax.nn.softmax(jnp.einsum("bhnd,bhmd->bhnm", qh, kh) * scale, axis=-1)
    xattn = jnp.einsum("bhnm,bhmd->bhnd", attn, vh).transpose(0, 2, 1, 3).reshape(B, N, C)
    x1 = x + xattn
    xn2 = _layernorm(x1, params["ln2_g"], params["ln2_b"])
    h = _gelu_tanh(xn2 @ params["w1"] + params["b1"])
    return x1 + h @ params["w2"] + params["b2"]


if __name__ == "__main__":
    B, Hs, Ws, C = 2, 4, 4, 32
    N = Hs * Ws
    num_heads = 4
    hidden = int(C * 4.0)

    key = jax.random.PRNGKey(0)
    ks = jax.random.split(key, 6)
    x = jax.random.normal(ks[0], (B, N, C), jnp.float32)

    params = {
        "ln1_g": jnp.ones((1, C), jnp.float32),
        "ln1_b": jnp.zeros((1, C), jnp.float32),
        "ln2_g": jnp.ones((1, C), jnp.float32),
        "ln2_b": jnp.zeros((1, C), jnp.float32),
        # S_GCN params: module shapes (H*H, W*W) and (1, C, H, W) (stored as (C, N));
        # module inits them to ones -- randomized here (deterministically) to exercise the math.
        "adj": 1.0 + 0.1 * jax.random.normal(ks[1], (N, N), jnp.float32),
        "para_cn": 1.0 + 0.1 * jax.random.normal(ks[2], (C, N), jnp.float32),
        # kv linear (bias=False), stored as W.T: (C, 2C)
        "w_kv": 0.02 * jax.random.normal(ks[3], (C, 2 * C), jnp.float32),
        # Mlp: fc1 (C->hidden), fc2 (hidden->C), biases init to 0 (per _init_weights)
        "w1": 0.02 * jax.random.normal(ks[4], (C, hidden), jnp.float32),
        "b1": jnp.zeros((1, hidden), jnp.float32),
        "w2": 0.02 * jax.random.normal(ks[5], (hidden, C), jnp.float32),
        "b2": jnp.zeros((1, C), jnp.float32),
    }

    out = jax.block_until_ready(trans_block(x, params, num_heads=num_heads))
    ref = jax.block_until_ready(reference(x, params, num_heads))

    assert out.shape == (B, N, C), out.shape
    err = float(jnp.max(jnp.abs(out - ref)))
    # Tolerance accounts for the bf16 MXU operands (f32 accumulation) requested
    # by the performance review; observed deviation is a few 1e-3.
    assert jnp.allclose(out, ref, atol=1e-2, rtol=1e-2), f"max abs err {err}"
    print("KERNEL_OK")
</pallas_src>

<mosaic_0001>
module attributes {stable_mosaic.version = 11 : i64} {
  func.func @fused_kernel(%arg0: i32, %arg1: memref<1x16x32xf32, #tpu.memory_space<vmem>>, %arg2: memref<1x32xf32, #tpu.memory_space<vmem>>, %arg3: memref<1x32xf32, #tpu.memory_space<vmem>>, %arg4: memref<16x16xf32, #tpu.memory_space<vmem>>, %arg5: memref<32x16xf32, #tpu.memory_space<vmem>>, %arg6: memref<32x64xf32, #tpu.memory_space<vmem>>, %arg7: memref<1x32xf32, #tpu.memory_space<vmem>>, %arg8: memref<1x32xf32, #tpu.memory_space<vmem>>, %arg9: memref<32x128xf32, #tpu.memory_space<vmem>>, %arg10: memref<1x128xf32, #tpu.memory_space<vmem>>, %arg11: memref<128x32xf32, #tpu.memory_space<vmem>>, %arg12: memref<1x32xf32, #tpu.memory_space<vmem>>, %arg13: memref<1x16x32xf32, #tpu.memory_space<vmem>>, %arg14: memref<32x16xf32, #tpu.memory_space<vmem>>) attributes {dimension_semantics = [#tpu.dimension_semantics<parallel>], iteration_bounds = array<i64: 2>, scalar_prefetch = 0 : i64, scratch_operands = 1 : i64, tpu.core_type = #tpu.core_type<tc>, window_params = [{transform_indices = @transform_0, window_bounds = array<i64: 1, 16, 32>}, {pipeline_mode = #tpu.pipeline_mode<synchronous>, transform_indices = @transform_1, window_bounds = array<i64: 1, 32>}, {pipeline_mode = #tpu.pipeline_mode<synchronous>, transform_indices = @transform_2, window_bounds = array<i64: 1, 32>}, {pipeline_mode = #tpu.pipeline_mode<synchronous>, transform_indices = @transform_3, window_bounds = array<i64: 16, 16>}, {pipeline_mode = #tpu.pipeline_mode<synchronous>, transform_indices = @transform_4, window_bounds = array<i64: 32, 16>}, {pipeline_mode = #tpu.pipeline_mode<synchronous>, transform_indices = @transform_5, window_bounds = array<i64: 32, 64>}, {pipeline_mode = #tpu.pipeline_mode<synchronous>, transform_indices = @transform_6, window_bounds = array<i64: 1, 32>}, {pipeline_mode = #tpu.pipeline_mode<synchronous>, transform_indices = @transform_7, window_bounds = array<i64: 1, 32>}, {pipeline_mode = #tpu.pipeline_mode<synchronous>, transform_indices = @transform_8, window_bounds = array<i64: 32, 128>}, {pipeline_mode = #tpu.pipeline_mode<synchronous>, transform_indices = @transform_9, window_bounds = array<i64: 1, 128>}, {pipeline_mode = #tpu.pipeline_mode<synchronous>, transform_indices = @transform_10, window_bounds = array<i64: 128, 32>}, {pipeline_mode = #tpu.pipeline_mode<synchronous>, transform_indices = @transform_11, window_bounds = array<i64: 1, 32>}, {transform_indices = @transform_12, window_bounds = array<i64: 1, 16, 32>}]} {
    %c0 = arith.constant 0 : index
    %c0_0 = arith.constant 0 : index
    %c0_1 = arith.constant 0 : index
    %0 = vector.load %arg1[%c0, %c0_0, %c0_1] : memref<1x16x32xf32, #tpu.memory_space<vmem>>, vector<1x16x32xf32>
    %1 = vector.shape_cast %0 : vector<1x16x32xf32> to vector<16x32xf32>
    %c0_2 = arith.constant 0 : index
    %c0_3 = arith.constant 0 : index
    %2 = vector.load %arg2[%c0_2, %c0_3] : memref<1x32xf32, #tpu.memory_space<vmem>>, vector<1x32xf32>
    %c0_4 = arith.constant 0 : index
    %c0_5 = arith.constant 0 : index
    %3 = vector.load %arg3[%c0_4, %c0_5] : memref<1x32xf32, #tpu.memory_space<vmem>>, vector<1x32xf32>
    %cst = arith.constant dense<0.000000e+00> : vector<16xf32>
    %4 = vector.multi_reduction <add>, %1, %cst [1] : vector<16x32xf32> to vector<16xf32>
    %5 = vector.shape_cast %4 : vector<16xf32> to vector<16x1xf32>
    %cst_6 = arith.constant 3.200000e+01 : f32
    %6 = vector.broadcast %cst_6 : f32 to vector<16x1xf32>
    %7 = arith.divf %5, %6 : vector<16x1xf32>
    %8 = vector.broadcast %7 : vector<16x1xf32> to vector<16x32xf32>
    %9 = arith.subf %1, %8 : vector<16x32xf32>
    %10 = arith.mulf %9, %9 : vector<16x32xf32>
    %cst_7 = arith.constant dense<0.000000e+00> : vector<16xf32>
    %11 = vector.multi_reduction <add>, %10, %cst_7 [1] : vector<16x32xf32> to vector<16xf32>
    %12 = vector.shape_cast %11 : vector<16xf32> to vector<16x1xf32>
    %cst_8 = arith.constant 3.200000e+01 : f32
    %13 = vector.broadcast %cst_8 : f32 to vector<16x1xf32>
    %14 = arith.divf %12, %13 : vector<16x1xf32>
    %15 = vector.broadcast %7 : vector<16x1xf32> to vector<16x32xf32>
    %16 = arith.subf %1, %15 : vector<16x32xf32>
    %cst_9 = arith.constant 9.99999974E-6 : f32
    %17 = vector.broadcast %cst_9 : f32 to vector<16x1xf32>
    %18 = arith.addf %14, %17 : vector<16x1xf32>
    %19 = math.rsqrt %18 : vector<16x1xf32>
    %20 = vector.broadcast %19 : vector<16x1xf32> to vector<16x32xf32>
    %21 = arith.mulf %16, %20 : vector<16x32xf32>
    %22 = vector.broadcast %2 : vector<1x32xf32> to vector<16x32xf32>
    %23 = arith.mulf %21, %22 : vector<16x32xf32>
    %24 = vector.broadcast %3 : vector<1x32xf32> to vector<16x32xf32>
    %25 = arith.addf %23, %24 : vector<16x32xf32>
    %cst_10 = arith.constant dense<0.000000e+00> : vector<16xf32>
    %26 = vector.multi_reduction <add>, %25, %cst_10 [1] : vector<16x32xf32> to vector<16xf32>
    %27 = vector.shape_cast %26 : vector<16xf32> to vector<16x1xf32>
    %cst_11 = arith.constant 3.200000e+01 : f32
    %28 = vector.broadcast %cst_11 : f32 to vector<16x1xf32>
    %29 = arith.divf %27, %28 : vector<16x1xf32>
    %30 = tpu.transpose %29, [1, 0] : vector<16x1xf32> -> vector<1x16xf32>
    %31 = vector.broadcast %30 : vector<1x16xf32> to vector<16x16xf32>
    %32 = vector.broadcast %29 : vector<16x1xf32> to vector<16x16xf32>
    %33 = arith.subf %31, %32 : vector<16x16xf32>
    %34 = arith.negf %33 : vector<16x16xf32>
    %35 = math.exp %34 : vector<16x16xf32>
    %cst_12 = arith.constant 1.000000e+00 : f32
    %36 = vector.broadcast %cst_12 : f32 to vector<16x16xf32>
    %37 = arith.addf %36, %35 : vector<16x16xf32>
    %38 = arith.divf %36, %37 : vector<16x16xf32>
    %cst_13 = arith.constant 5.000000e-01 : f32
    %39 = vector.broadcast %cst_13 : f32 to vector<16x16xf32>
    %40 = arith.subf %38, %39 : vector<16x16xf32>
    %41 = math.absf %40 : vector<16x16xf32>
    %cst_14 = arith.constant 5.000000e-01 : f32
    %42 = vector.broadcast %cst_14 : f32 to vector<16x16xf32>
    %43 = arith.subf %41, %42 : vector<16x16xf32>
    %44 = math.absf %43 : vector<16x16xf32>
    %cst_15 = arith.constant 2.000000e+00 : f32
    %45 = vector.broadcast %cst_15 : f32 to vector<16x16xf32>
    %46 = arith.mulf %44, %45 : vector<16x16xf32>
    %c0_16 = arith.constant 0 : index
    %c0_17 = arith.constant 0 : index
    %47 = vector.load %arg4[%c0_16, %c0_17] : memref<16x16xf32, #tpu.memory_space<vmem>>, vector<16x16xf32>
    %48 = arith.mulf %47, %46 : vector<16x16xf32>
    %49 = arith.truncf %25 : vector<16x32xf32> to vector<16x32xbf16>
    %50 = arith.truncf %48 : vector<16x16xf32> to vector<16x16xbf16>
    %cst_18 = arith.constant dense<0.000000e+00> : vector<32x16xf32>
    %51 = tpu.matmul %49, %50, %cst_18 {dimension_numbers = #tpu.dot_dimension_numbers<[0], [0], [1], [1], [0, 1, 1, 1], [], []>} : vector<16x32xbf16>, vector<16x16xbf16>, vector<32x16xf32> -> vector<32x16xf32>
    %c0_19 = arith.constant 0 : index
    %c0_20 = arith.constant 0 : index
    %52 = vector.load %arg5[%c0_19, %c0_20] : memref<32x16xf32, #tpu.memory_space<vmem>>, vector<32x16xf32>
    %53 = arith.mulf %51, %52 : vector<32x16xf32>
    %cst_21 = arith.constant 0.000000e+00 : f32
    %54 = vector.broadcast %cst_21 : f32 to vector<32x16xf32>
    %55 = arith.maximumf %53, %54 : vector<32x16xf32>
    %c0_22 = arith.constant 0 : index
    %c0_23 = arith.constant 0 : index
    %56 = vector.load %arg14[%c0_22, %c0_23] : memref<32x16xf32, #tpu.memory_space<vmem>>, vector<32x16xf32>
    tpu.vector_store %arg14[%c0_22, %c0_23], %55 {strides = array<i32>} : memref<32x16xf32, #tpu.memory_space<vmem>>, vector<32x16xf32>,
    %c0_24 = arith.constant 0 : index
    %c0_25 = arith.constant 0 : index
    %57 = tpu.strided_load %arg14[%c0_24, %c0_25] {strides = array<i32: 2, 1>} : memref<32x16xf32, #tpu.memory_space<vmem>>, vector<16x16xf32>
    %c1 = arith.constant 1 : index
    %c0_26 = arith.constant 0 : index
    %58 = tpu.strided_load %arg14[%c1, %c0_26] {strides = array<i32: 2, 1>} : memref<32x16xf32, #tpu.memory_space<vmem>>, vector<16x16xf32>
    %59 = tpu.concatenate %57, %58 in 1 : vector<16x16xf32>, vector<16x16xf32> -> vector<16x32xf32>
    %60 = arith.truncf %25 : vector<16x32xf32> to vector<16x32xbf16>
    %c0_27 = arith.constant 0 : index
    %c0_28 = arith.constant 0 : index
    %61 = vector.load %arg6[%c0_27, %c0_28] : memref<32x64xf32, #tpu.memory_space<vmem>>, vector<32x64xf32>
    %62 = arith.truncf %61 : vector<32x64xf32> to vector<32x64xbf16>
    %cst_29 = arith.constant dense<0.000000e+00> : vector<16x64xf32>
    %63 = tpu.matmul %60, %62, %cst_29 {dimension_numbers = #tpu.dot_dimension_numbers<[1], [0], [0], [1], [0, 0, 1, 1], [], []>} : vector<16x32xbf16>, vector<32x64xbf16>, vector<16x64xf32> -> vector<16x64xf32>
    %64 = vector.extract_strided_slice %59 {offsets = [0, 0], sizes = [16, 8], strides = [1, 1]} : vector<16x32xf32> to vector<16x8xf32>
    %65 = arith.truncf %64 : vector<16x8xf32> to vector<16x8xbf16>
    %66 = vector.extract_strided_slice %63 {offsets = [0, 0], sizes = [16, 8], strides = [1, 1]} : vector<16x64xf32> to vector<16x8xf32>
    %67 = arith.truncf %66 : vector<16x8xf32> to vector<16x8xbf16>
    %68 = vector.extract_strided_slice %63 {offsets = [0, 32], sizes = [16, 8], strides = [1, 1]} : vector<16x64xf32> to vector<16x8xf32>
    %69 = arith.truncf %68 : vector<16x8xf32> to vector<16x8xbf16>
    %cst_30 = arith.constant dense<0.000000e+00> : vector<16x16xf32>
    %70 = tpu.matmul %65, %67, %cst_30 {dimension_numbers = #tpu.dot_dimension_numbers<[1], [1], [0], [0], [0, 0, 1, 0], [], []>} : vector<16x8xbf16>, vector<16x8xbf16>, vector<16x16xf32> -> vector<16x16xf32>
    %cst_31 = arith.constant 0.353553623 : f32
    %71 = vector.broadcast %cst_31 : f32 to vector<16x16xf32>
    %72 = arith.mulf %70, %71 : vector<16x16xf32>
    %cst_32 = arith.constant dense<0xFF800000> : vector<16xf32>
    %73 = vector.multi_reduction <maximumf>, %72, %cst_32 [1] : vector<16x16xf32> to vector<16xf32>
    %74 = vector.shape_cast %73 : vector<16xf32> to vector<16x1xf32>
    %75 = vector.broadcast %74 : vector<16x1xf32> to vector<16x16xf32>
    %76 = arith.subf %72, %75 : vector<16x16xf32>
    %77 = math.exp %76 : vector<16x16xf32>
    %cst_33 = arith.constant dense<0.000000e+00> : vector<16xf32>
    %78 = vector.multi_reduction <add>, %77, %cst_33 [1] : vector<16x16xf32> to vector<16xf32>
    %79 = vector.shape_cast %78 : vector<16xf32> to vector<16x1xf32>
    %80 = tpu.reciprocal %79 {approx = true} : vector<16x1xf32> -> vector<16x1xf32>
    %81 = vector.broadcast %80 : vector<16x1xf32> to vector<16x16xf32>
    %82 = arith.mulf %77, %81 : vector<16x16xf32>
    %83 = arith.truncf %82 : vector<16x16xf32> to vector<16x16xbf16>
    %cst_34 = arith.constant dense<0.000000e+00> : vector<16x8xf32>
    %84 = tpu.matmul %83, %69, %cst_34 {dimension_numbers = #tpu.dot_dimension_numbers<[1], [0], [0], [1], [0, 0, 1, 1], [], []>} : vector<16x16xbf16>, vector<16x8xbf16>, vector<16x8xf32> -> vector<16x8xf32>
    %85 = vector.extract_strided_slice %59 {offsets = [0, 8], sizes = [16, 8], strides = [1, 1]} : vector<16x32xf32> to vector<16x8xf32>
    %86 = arith.truncf %85 : vector<16x8xf32> to vector<16x8xbf16>
    %87 = vector.extract_strided_slice %63 {offsets = [0, 8], sizes = [16, 8], strides = [1, 1]} : vector<16x64xf32> to vector<16x8xf32>
    %88 = arith.truncf %87 : vector<16x8xf32> to vector<16x8xbf16>
    %89 = vector.extract_strided_slice %63 {offsets = [0, 40], sizes = [16, 8], strides = [1, 1]} : vector<16x64xf32> to vector<16x8xf32>
    %90 = arith.truncf %89 : vector<16x8xf32> to vector<16x8xbf16>
    %cst_35 = arith.constant dense<0.000000e+00> : vector<16x16xf32>
    %91 = tpu.matmul %86, %88, %cst_35 {dimension_numbers = #tpu.dot_dimension_numbers<[1], [1], [0], [0], [0, 0, 1, 0], [], []>} : vector<16x8xbf16>, vector<16x8xbf16>, vector<16x16xf32> -> vector<16x16xf32>
    %cst_36 = arith.constant 0.353553623 : f32
    %92 = vector.broadcast %cst_36 : f32 to vector<16x16xf32>
    %93 = arith.mulf %91, %92 : vector<16x16xf32>
    %cst_37 = arith.constant dense<0xFF800000> : vector<16xf32>
    %94 = vector.multi_reduction <maximumf>, %93, %cst_37 [1] : vector<16x16xf32> to vector<16xf32>
    %95 = vector.shape_cast %94 : vector<16xf32> to vector<16x1xf32>
    %96 = vector.broadcast %95 : vector<16x1xf32> to vector<16x16xf32>
    %97 = arith.subf %93, %96 : vector<16x16xf32>
    %98 = math.exp %97 : vector<16x16xf32>
    %cst_38 = arith.constant dense<0.000000e+00> : vector<16xf32>
    %99 = vector.multi_reduction <add>, %98, %cst_38 [1] : vector<16x16xf32> to vector<16xf32>
    %100 = vector.shape_cast %99 : vector<16xf32> to vector<16x1xf32>
    %101 = tpu.reciprocal %100 {approx = true} : vector<16x1xf32> -> vector<16x1xf32>
    %102 = vector.broadcast %101 : vector<16x1xf32> to vector<16x16xf32>
    %103 = arith.mulf %98, %102 : vector<16x16xf32>
    %104 = arith.truncf %103 : vector<16x16xf32> to vector<16x16xbf16>
    %cst_39 = arith.constant dense<0.000000e+00> : vector<16x8xf32>
    %105 = tpu.matmul %104, %90, %cst_39 {dimension_numbers = #tpu.dot_dimension_numbers<[1], [0], [0], [1], [0, 0, 1, 1], [], []>} : vector<16x16xbf16>, vector<16x8xbf16>, vector<16x8xf32> -> vector<16x8xf32>
    %106 = vector.extract_strided_slice %59 {offsets = [0, 16], sizes = [16, 8], strides = [1, 1]} : vector<16x32xf32> to vector<16x8xf32>
    %107 = arith.truncf %106 : vector<16x8xf32> to vector<16x8xbf16>
    %108 = vector.extract_strided_slice %63 {offsets = [0, 16], sizes = [16, 8], strides = [1, 1]} : vector<16x64xf32> to vector<16x8xf32>
    %109 = arith.truncf %108 : vector<16x8xf32> to vector<16x8xbf16>
    %110 = vector.extract_strided_slice %63 {offsets = [0, 48], sizes = [16, 8], strides = [1, 1]} : vector<16x64xf32> to vector<16x8xf32>
    %111 = arith.truncf %110 : vector<16x8xf32> to vector<16x8xbf16>
    %cst_40 = arith.constant dense<0.000000e+00> : vector<16x16xf32>
    %112 = tpu.matmul %107, %109, %cst_40 {dimension_numbers = #tpu.dot_dimension_numbers<[1], [1], [0], [0], [0, 0, 1, 0], [], []>} : vector<16x8xbf16>, vector<16x8xbf16>, vector<16x16xf32> -> vector<16x16xf32>
    %cst_41 = arith.constant 0.353553623 : f32
    %113 = vector.broadcast %cst_41 : f32 to vector<16x16xf32>
    %114 = arith.mulf %112, %113 : vector<16x16xf32>
    %cst_42 = arith.constant dense<0xFF800000> : vector<16xf32>
    %115 = vector.multi_reduction <maximumf>, %114, %cst_42 [1] : vector<16x16xf32> to vector<16xf32>
    %116 = vector.shape_cast %115 : vector<16xf32> to vector<16x1xf32>
    %117 = vector.broadcast %116 : vector<16x1xf32> to vector<16x16xf32>
    %118 = arith.subf %114, %117 : vector<16x16xf32>
    %119 = math.exp %118 : vector<16x16xf32>
    %cst_43 = arith.constant dense<0.000000e+00> : vector<16xf32>
    %120 = vector.multi_reduction <add>, %119, %cst_43 [1] : vector<16x16xf32> to vector<16xf32>
    %121 = vector.shape_cast %120 : vector<16xf32> to vector<16x1xf32>
    %122 = tpu.reciprocal %121 {approx = true} : vector<16x1xf32> -> vector<16x1xf32>
    %123 = vector.broadcast %122 : vector<16x1xf32> to vector<16x16xf32>
    %124 = arith.mulf %119, %123 : vector<16x16xf32>
    %125 = arith.truncf %124 : vector<16x16xf32> to vector<16x16xbf16>
    %cst_44 = arith.constant dense<0.000000e+00> : vector<16x8xf32>
    %126 = tpu.matmul %125, %111, %cst_44 {dimension_numbers = #tpu.dot_dimension_numbers<[1], [0], [0], [1], [0, 0, 1, 1], [], []>} : vector<16x16xbf16>, vector<16x8xbf16>, vector<16x8xf32> -> vector<16x8xf32>
    %127 = vector.extract_strided_slice %59 {offsets = [0, 24], sizes = [16, 8], strides = [1, 1]} : vector<16x32xf32> to vector<16x8xf32>
    %128 = arith.truncf %127 : vector<16x8xf32> to vector<16x8xbf16>
    %129 = vector.extract_strided_slice %63 {offsets = [0, 24], sizes = [16, 8], strides = [1, 1]} : vector<16x64xf32> to vector<16x8xf32>
    %130 = arith.truncf %129 : vector<16x8xf32> to vector<16x8xbf16>
    %131 = vector.extract_strided_slice %63 {offsets = [0, 56], sizes = [16, 8], strides = [1, 1]} : vector<16x64xf32> to vector<16x8xf32>
    %132 = arith.truncf %131 : vector<16x8xf32> to vector<16x8xbf16>
    %cst_45 = arith.constant dense<0.000000e+00> : vector<16x16xf32>
    %133 = tpu.matmul %128, %130, %cst_45 {dimension_numbers = #tpu.dot_dimension_numbers<[1], [1], [0], [0], [0, 0, 1, 0], [], []>} : vector<16x8xbf16>, vector<16x8xbf16>, vector<16x16xf32> -> vector<16x16xf32>
    %cst_46 = arith.constant 0.353553623 : f32
    %134 = vector.broadcast %cst_46 : f32 to vector<16x16xf32>
    %135 = arith.mulf %133, %134 : vector<16x16xf32>
    %cst_47 = arith.constant dense<0xFF800000> : vector<16xf32>
    %136 = vector.multi_reduction <maximumf>, %135, %cst_47 [1] : vector<16x16xf32> to vector<16xf32>
    %137 = vector.shape_cast %136 : vector<16xf32> to vector<16x1xf32>
    %138 = vector.broadcast %137 : vector<16x1xf32> to vector<16x16xf32>
    %139 = arith.subf %135, %138 : vector<16x16xf32>
    %140 = math.exp %139 : vector<16x16xf32>
    %cst_48 = arith.constant dense<0.000000e+00> : vector<16xf32>
    %141 = vector.multi_reduction <add>, %140, %cst_48 [1] : vector<16x16xf32> to vector<16xf32>
    %142 = vector.shape_cast %141 : vector<16xf32> to vector<16x1xf32>
    %143 = tpu.reciprocal %142 {approx = true} : vector<16x1xf32> -> vector<16x1xf32>
    %144 = vector.broadcast %143 : vector<16x1xf32> to vector<16x16xf32>
    %145 = arith.mulf %140, %144 : vector<16x16xf32>
    %146 = arith.truncf %145 : vector<16x16xf32> to vector<16x16xbf16>
    %cst_49 = arith.constant dense<0.000000e+00> : vector<16x8xf32>
    %147 = tpu.matmul %146, %132, %cst_49 {dimension_numbers = #tpu.dot_dimension_numbers<[1], [0], [0], [1], [0, 0, 1, 1], [], []>} : vector<16x16xbf16>, vector<16x8xbf16>, vector<16x8xf32> -> vector<16x8xf32>
    %148 = tpu.concatenate %84, %105, %126, %147 in 1 : vector<16x8xf32>, vector<16x8xf32>, vector<16x8xf32>, vector<16x8xf32> -> vector<16x32xf32>
    %149 = arith.addf %1, %148 : vector<16x32xf32>
    %c0_50 = arith.constant 0 : index
    %c0_51 = arith.constant 0 : index
    %150 = vector.load %arg7[%c0_50, %c0_51] : memref<1x32xf32, #tpu.memory_space<vmem>>, vector<1x32xf32>
    %c0_52 = arith.constant 0 : index
    %c0_53 = arith.constant 0 : index
    %151 = vector.load %arg8[%c0_52, %c0_53] : memref<1x32xf32, #tpu.memory_space<vmem>>, vector<1x32xf32>
    %cst_54 = arith.constant dense<0.000000e+00> : vector<16xf32>
    %152 = vector.multi_reduction <add>, %149, %cst_54 [1] : vector<16x32xf32> to vector<16xf32>
    %153 = vector.shape_cast %152 : vector<16xf32> to vector<16x1xf32>
    %cst_55 = arith.constant 3.200000e+01 : f32
    %154 = vector.broadcast %cst_55 : f32 to vector<16x1xf32>
    %155 = arith.divf %153, %154 : vector<16x1xf32>
    %156 = vector.broadcast %155 : vector<16x1xf32> to vector<16x32xf32>
    %157 = arith.subf %149, %156 : vector<16x32xf32>
    %158 = arith.mulf %157, %157 : vector<16x32xf32>
    %cst_56 = arith.constant dense<0.000000e+00> : vector<16xf32>
    %159 = vector.multi_reduction <add>, %158, %cst_56 [1] : vector<16x32xf32> to vector<16xf32>
    %160 = vector.shape_cast %159 : vector<16xf32> to vector<16x1xf32>
    %cst_57 = arith.constant 3.200000e+01 : f32
    %161 = vector.broadcast %cst_57 : f32 to vector<16x1xf32>
    %162 = arith.divf %160, %161 : vector<16x1xf32>
    %163 = vector.broadcast %155 : vector<16x1xf32> to vector<16x32xf32>
    %164 = arith.subf %149, %163 : vector<16x32xf32>
    %cst_58 = arith.constant 9.99999974E-6 : f32
    %165 = vector.broadcast %cst_58 : f32 to vector<16x1xf32>
    %166 = arith.addf %162, %165 : vector<16x1xf32>
    %167 = math.rsqrt %166 : vector<16x1xf32>
    %168 = vector.broadcast %167 : vector<16x1xf32> to vector<16x32xf32>
    %169 = arith.mulf %164, %168 : vector<16x32xf32>
    %170 = vector.broadcast %150 : vector<1x32xf32> to vector<16x32xf32>
    %171 = arith.mulf %169, %170 : vector<16x32xf32>
    %172 = vector.broadcast %151 : vector<1x32xf32> to vector<16x32xf32>
    %173 = arith.addf %171, %172 : vector<16x32xf32>
    %174 = arith.truncf %173 : vector<16x32xf32> to vector<16x32xbf16>
    %c0_59 = arith.constant 0 : index
    %c0_60 = arith.constant 0 : index
    %175 = vector.load %arg9[%c0_59, %c0_60] : memref<32x128xf32, #tpu.memory_space<vmem>>, vector<32x128xf32>
    %176 = arith.truncf %175 : vector<32x128xf32> to vector<32x128xbf16>
    %cst_61 = arith.constant dense<0.000000e+00> : vector<16x128xf32>
    %177 = tpu.matmul %174, %176, %cst_61 {dimension_numbers = #tpu.dot_dimension_numbers<[1], [0], [0], [1], [0, 0, 1, 1], [], []>} : vector<16x32xbf16>, vector<32x128xbf16>, vector<16x128xf32> -> vector<16x128xf32>
    %c0_62 = arith.constant 0 : index
    %c0_63 = arith.constant 0 : index
    %178 = vector.load %arg10[%c0_62, %c0_63] : memref<1x128xf32, #tpu.memory_space<vmem>>, vector<1x128xf32>
    %179 = vector.broadcast %178 : vector<1x128xf32> to vector<16x128xf32>
    %180 = arith.addf %177, %179 : vector<16x128xf32>
    %cst_64 = arith.constant 5.000000e-01 : f32
    %181 = vector.broadcast %cst_64 : f32 to vector<16x128xf32>
    %182 = arith.mulf %181, %180 : vector<16x128xf32>
    %cst_65 = arith.constant 4.471500e-02 : f32
    %183 = vector.broadcast %cst_65 : f32 to vector<16x128xf32>
    %184 = arith.mulf %183, %180 : vector<16x128xf32>
    %185 = arith.mulf %184, %180 : vector<16x128xf32>
    %186 = arith.mulf %185, %180 : vector<16x128xf32>
    %187 = arith.addf %180, %186 : vector<16x128xf32>
    %cst_66 = arith.constant 0.797884583 : f32
    %188 = vector.broadcast %cst_66 : f32 to vector<16x128xf32>
    %189 = arith.mulf %188, %187 : vector<16x128xf32>
    %190 = math.tanh %189 : vector<16x128xf32>
    %cst_67 = arith.constant 1.000000e+00 : f32
    %191 = vector.broadcast %cst_67 : f32 to vector<16x128xf32>
    %192 = arith.addf %191, %190 : vector<16x128xf32>
    %193 = arith.mulf %182, %192 : vector<16x128xf32>
    %194 = arith.truncf %193 : vector<16x128xf32> to vector<16x128xbf16>
    %c0_68 = arith.constant 0 : index
    %c0_69 = arith.constant 0 : index
    %195 = vector.load %arg11[%c0_68, %c0_69] : memref<128x32xf32, #tpu.memory_space<vmem>>, vector<128x32xf32>
    %196 = arith.truncf %195 : vector<128x32xf32> to vector<128x32xbf16>
    %cst_70 = arith.constant dense<0.000000e+00> : vector<16x32xf32>
    %197 = tpu.matmul %194, %196, %cst_70 {dimension_numbers = #tpu.dot_dimension_numbers<[1], [0], [0], [1], [0, 0, 1, 1], [], []>} : vector<16x128xbf16>, vector<128x32xbf16>, vector<16x32xf32> -> vector<16x32xf32>
    %c0_71 = arith.constant 0 : index
    %c0_72 = arith.constant 0 : index
    %198 = vector.load %arg12[%c0_71, %c0_72] : memref<1x32xf32, #tpu.memory_space<vmem>>, vector<1x32xf32>
    %199 = vector.broadcast %198 : vector<1x32xf32> to vector<16x32xf32>
    %200 = arith.addf %197, %199 : vector<16x32xf32>
    %201 = arith.addf %149, %200 : vector<16x32xf32>
    %c0_73 = arith.constant 0 : index
    %c0_74 = arith.constant 0 : index
    %c0_75 = arith.constant 0 : index
    %202 = vector.load %arg13[%c0_73, %c0_74, %c0_75] : memref<1x16x32xf32, #tpu.memory_space<vmem>>, vector<1x16x32xf32>
    %203 = vector.shape_cast %202 : vector<1x16x32xf32> to vector<16x32xf32>
    %204 = vector.shape_cast %201 : vector<16x32xf32> to vector<1x16x32xf32>
    tpu.vector_store %arg13[%c0_73, %c0_74, %c0_75], %204 {strides = array<i32>} : memref<1x16x32xf32, #tpu.memory_space<vmem>>, vector<1x16x32xf32>,
    return
  }
  func.func @transform_0(%arg0: i32) -> (i32, i32, i32) {
    %c0_i32 = arith.constant 0 : i32
    %c0_i32_0 = arith.constant 0 : i32
    %c0_i32_1 = arith.constant 0 : i32
    return %arg0, %c0_i32, %c0_i32_0 : i32, i32, i32
  }
  func.func @transform_1(%arg0: i32) -> (i32, i32) {
    %c0_i32 = arith.constant 0 : i32
    %c0_i32_0 = arith.constant 0 : i32
    %c0_i32_1 = arith.constant 0 : i32
    return %c0_i32, %c0_i32_0 : i32, i32
  }
  func.func @transform_2(%arg0: i32) -> (i32, i32) {
    %c0_i32 = arith.constant 0 : i32
    %c0_i32_0 = arith.constant 0 : i32
    %c0_i32_1 = arith.constant 0 : i32
    return %c0_i32, %c0_i32_0 : i32, i32
  }
  func.func @transform_3(%arg0: i32) -> (i32, i32) {
    %c0_i32 = arith.constant 0 : i32
    %c0_i32_0 = arith.constant 0 : i32
    %c0_i32_1 = arith.constant 0 : i32
    return %c0_i32, %c0_i32_0 : i32, i32
  }
  func.func @transform_4(%arg0: i32) -> (i32, i32) {
    %c0_i32 = arith.constant 0 : i32
    %c0_i32_0 = arith.constant 0 : i32
    %c0_i32_1 = arith.constant 0 : i32
    return %c0_i32, %c0_i32_0 : i32, i32
  }
  func.func @transform_5(%arg0: i32) -> (i32, i32) {
    %c0_i32 = arith.constant 0 : i32
    %c0_i32_0 = arith.constant 0 : i32
    %c0_i32_1 = arith.constant 0 : i32
    return %c0_i32, %c0_i32_0 : i32, i32
  }
  func.func @transform_6(%arg0: i32) -> (i32, i32) {
    %c0_i32 = arith.constant 0 : i32
    %c0_i32_0 = arith.constant 0 : i32
    %c0_i32_1 = arith.constant 0 : i32
    return %c0_i32, %c0_i32_0 : i32, i32
  }
  func.func @transform_7(%arg0: i32) -> (i32, i32) {
    %c0_i32 = arith.constant 0 : i32
    %c0_i32_0 = arith.constant 0 : i32
    %c0_i32_1 = arith.constant 0 : i32
    return %c0_i32, %c0_i32_0 : i32, i32
  }
  func.func @transform_8(%arg0: i32) -> (i32, i32) {
    %c0_i32 = arith.constant 0 : i32
    %c0_i32_0 = arith.constant 0 : i32
    %c0_i32_1 = arith.constant 0 : i32
    return %c0_i32, %c0_i32_0 : i32, i32
  }
  func.func @transform_9(%arg0: i32) -> (i32, i32) {
    %c0_i32 = arith.constant 0 : i32
    %c0_i32_0 = arith.constant 0 : i32
    %c0_i32_1 = arith.constant 0 : i32
    return %c0_i32, %c0_i32_0 : i32, i32
  }
  func.func @transform_10(%arg0: i32) -> (i32, i32) {
    %c0_i32 = arith.constant 0 : i32
    %c0_i32_0 = arith.constant 0 : i32
    %c0_i32_1 = arith.constant 0 : i32
    return %c0_i32, %c0_i32_0 : i32, i32
  }
  func.func @transform_11(%arg0: i32) -> (i32, i32) {
    %c0_i32 = arith.constant 0 : i32
    %c0_i32_0 = arith.constant 0 : i32
    %c0_i32_1 = arith.constant 0 : i32
    return %c0_i32, %c0_i32_0 : i32, i32
  }
  func.func @transform_12(%arg0: i32) -> (i32, i32, i32) {
    %c0_i32 = arith.constant 0 : i32
    %c0_i32_0 = arith.constant 0 : i32
    %c0_i32_1 = arith.constant 0 : i32
    return %arg0, %c0_i32, %c0_i32_0 : i32, i32, i32
  }
}

</mosaic_0001>

<llo_original>
// kernel: tpu_custom_call.1
$region0: #{tpu_custom_call.1}
  #allocation0 [shape = 'u32[]', space=smem, size = 0x4, offset = 0x4, fixed_abs, tag = 'smem constant byte address 0x4 - core index']
  #allocation1 [shape = 'u32[144,128]{1,0:T(1,128)}', space=vmem, size = 0x12000, scoped, tag = 'internal scratch']
  #allocation2 [shape = 'f32[32,16]{1,0:T(8,128)}', space=vmem, size = 0x4000, scoped, tag = 'scratch operand']
  %s0 = inlined_call_operand.vmem [shape: f32[2,16,32], index: 0, kind: input, shape index: {}]
  %s1 = inlined_call_operand.vmem [shape: f32[1,32], index: 1, kind: input, shape index: {}]
  %s2 = inlined_call_operand.vmem [shape: f32[1,32], index: 2, kind: input, shape index: {}]
  %s3 = inlined_call_operand.vmem [shape: f32[16,16], index: 3, kind: input, shape index: {}]
  %s4 = inlined_call_operand.vmem [shape: f32[32,16], index: 4, kind: input, shape index: {}]
  %s5 = inlined_call_operand.vmem [shape: f32[32,64], index: 5, kind: input, shape index: {}]
  %s6 = inlined_call_operand.vmem [shape: f32[1,32], index: 6, kind: input, shape index: {}]
  %s7 = inlined_call_operand.vmem [shape: f32[1,32], index: 7, kind: input, shape index: {}]
  %s8 = inlined_call_operand.vmem [shape: f32[32,128], index: 8, kind: input, shape index: {}]
  %s9 = inlined_call_operand.vmem [shape: f32[1,128], index: 9, kind: input, shape index: {}]
  %s10 = inlined_call_operand.vmem [shape: f32[128,32], index: 10, kind: input, shape index: {}]
  %s11 = inlined_call_operand.vmem [shape: f32[1,32], index: 11, kind: input, shape index: {}]
  %s12 = inlined_call_operand.hbm [shape: f32[2,16,32], index: 12, kind: output, shape index: {}]
  %s13 = sld [smem:[#allocation0]]
  $region81: #{tpu_custom_call.1} parent=0
    _
  %s15 = ssub.s32 1, %s13
  %s16 = scalar_select 0, %s15, %s13
  $region1: #{tpu_custom_call.1} parent=0
    #allocation3 [shape = 'u8[16384]{0}', space=vmem, size = 0x4000, scoped, tag = 'output window, operand 0']
    #allocation4 [shape = 's32[2]{0}', space=sflag, size = 0x8, scoped, tag = 'scoped memory for tpu_custom_call.1']
    %17 = vsyncpa [#allocation4], 0
    %s18 = scalar_lea.sflag [#allocation4], 1
    %19 = vsyncpa %s18, 0
    loop: start=0, step=1, limit=4
    $region2: #{tpu_custom_call.1} parent=1 // loop_pre_header
      _
    $region3: #{tpu_custom_call.1} parent=1 // loop_header
      %s21 = sphi 0, %s25
      %p22 = scmp.ge.s32.totalorder %s21, 4
      %s31 = sphi 0, %s33
      %s34 = sphi 0, %s31
      %s35 = sphi 0, %s34
      %s51 = sphi 0, %s35
      %s55 = sphi 0, %s55
      %s57 = sphi 0, %s55
      %s58 = sphi 0, %s57
      %s72 = sphi 0, %s58
      %s76 = sphi 0, %s76
      %s78 = sphi 0, %s76
      %s79 = sphi 0, %s78
      %s93 = sphi 0, %s79
      %s97 = sphi 0, %s97
      %s99 = sphi 0, %s97
      %s100 = sphi 0, %s99
      %s114 = sphi 0, %s100
      %s118 = sphi 0, %s118
      %s120 = sphi 0, %s118
      %s121 = sphi 0, %s120
      %s135 = sphi 0, %s121
      %s139 = sphi 0, %s139
      %s141 = sphi 0, %s139
      %s142 = sphi 0, %s141
      %s156 = sphi 0, %s142
      %s160 = sphi 0, %s160
      %s162 = sphi 0, %s160
      %s163 = sphi 0, %s162
      %s177 = sphi 0, %s163
      %s181 = sphi 0, %s181
      %s183 = sphi 0, %s181
      %s184 = sphi 0, %s183
      %s198 = sphi 0, %s184
      %s202 = sphi 0, %s202
      %s204 = sphi 0, %s202
      %s205 = sphi 0, %s204
      %s219 = sphi 0, %s205
      %s223 = sphi 0, %s223
      %s225 = sphi 0, %s223
      %s226 = sphi 0, %s225
      %s240 = sphi 0, %s226
      %s244 = sphi 0, %s244
      %s246 = sphi 0, %s244
      %s247 = sphi 0, %s246
      %s261 = sphi 0, %s247
      %s265 = sphi 0, %s265
      %s267 = sphi 0, %s265
      %s268 = sphi 0, %s267
      %s282 = sphi 0, %s268
      %s288 = sphi 0, %s290
      %s291 = sphi 0, %s288
      %s292 = sphi 0, %s291
      %s308 = sphi 0, %s292
    $region4: #{tpu_custom_call.1} parent=1 // loop_header_branch
      %24 = sbr.rel (%p22) target = $region8
    $region5: #{tpu_custom_call.1} parent=1 // loop_body
      %s26 = ssub.s32 %s21, 1
      %s27 = ssub.s32 %s21, 2
      %s28 = sadd.s32 %s21, 1
      %s29 = ssub.s32 %s21, %s28
      %p30 = scmp.eq.s32.totalorder %s29, 0
      %s32 = sadd.s32 %s31, 1
      %s33 = scalar_select %p30, %s31, %s32
      %p36 = pneg %p30
      %p37 = scmp.eq.s32.totalorder %s21, 1
      %p38 = por %p36, %p37
      %p39 = scmp.ne.s32.totalorder %s31, %s34
      %p40 = scmp.eq.s32.totalorder %s21, 0
      %p41 = por %p39, %p40
      %p42 = scmp.ne.s32.totalorder %s31, %s34
      %p43 = scmp.eq.s32.totalorder %s26, 1
      %p44 = por %p42, %p43
      %p45 = scmp.ne.s32.totalorder %s34, %s35
      %p46 = scmp.eq.s32.totalorder %s26, 0
      %p47 = por %p45, %p46
      %p48 = scmp.ne.s32.totalorder %s34, %s35
      %p49 = scmp.eq.s32.totalorder %s27, 1
      %p50 = por %p48, %p49
      %p52 = scmp.ne.s32.totalorder %s35, %s51
      %p53 = scmp.eq.s32.totalorder %s27, 0
      %p54 = por %p52, %p53
      %s56 = sadd.s32 %s55, 1
      %p59 = scmp.eq.s32.totalorder %s21, 1
      %p60 = scmp.ne.s32.totalorder %s55, %s57
      %p61 = scmp.eq.s32.totalorder %s21, 0
      %p62 = por %p60, %p61
      %p63 = scmp.ne.s32.totalorder %s55, %s57
      %p64 = scmp.eq.s32.totalorder %s26, 1
      %p65 = por %p63, %p64
      %p66 = scmp.ne.s32.totalorder %s57, %s58
      %p67 = scmp.eq.s32.totalorder %s26, 0
      %p68 = por %p66, %p67
      %p69 = scmp.ne.s32.totalorder %s57, %s58
      %p70 = scmp.eq.s32.totalorder %s27, 1
      %p71 = por %p69, %p70
      %p73 = scmp.ne.s32.totalorder %s58, %s72
      %p74 = scmp.eq.s32.totalorder %s27, 0
      %p75 = por %p73, %p74
      %s77 = sadd.s32 %s76, 1
      %p80 = scmp.eq.s32.totalorder %s21, 1
      %p81 = scmp.ne.s32.totalorder %s76, %s78
      %p82 = scmp.eq.s32.totalorder %s21, 0
      %p83 = por %p81, %p82
      %p84 = scmp.ne.s32.totalorder %s76, %s78
      %p85 = scmp.eq.s32.totalorder %s26, 1
      %p86 = por %p84, %p85
      %p87 = scmp.ne.s32.totalorder %s78, %s79
      %p88 = scmp.eq.s32.totalorder %s26, 0
      %p89 = por %p87, %p88
      %p90 = scmp.ne.s32.totalorder %s78, %s79
      %p91 = scmp.eq.s32.totalorder %s27, 1
      %p92 = por %p90, %p91
      %p94 = scmp.ne.s32.totalorder %s79, %s93
      %p95 = scmp.eq.s32.totalorder %s27, 0
      %p96 = por %p94, %p95
      %s98 = sadd.s32 %s97, 1
      %p101 = scmp.eq.s32.totalorder %s21, 1
      %p102 = scmp.ne.s32.totalorder %s97, %s99
      %p103 = scmp.eq.s32.totalorder %s21, 0
      %p104 = por %p102, %p103
      %p105 = scmp.ne.s32.totalorder %s97, %s99
      %p106 = scmp.eq.s32.totalorder %s26, 1
      %p107 = por %p105, %p106
      %p108 = scmp.ne.s32.totalorder %s99, %s100
      %p109 = scmp.eq.s32.totalorder %s26, 0
      %p110 = por %p108, %p109
      %p111 = scmp.ne.s32.totalorder %s99, %s100
      %p112 = scmp.eq.s32.totalorder %s27, 1
      %p113 = por %p111, %p112
      %p115 = scmp.ne.s32.totalorder %s100, %s114
      %p116 = scmp.eq.s32.totalorder %s27, 0
      %p117 = por %p115, %p116
      %s119 = sadd.s32 %s118, 1
      %p122 = scmp.eq.s32.totalorder %s21, 1
      %p123 = scmp.ne.s32.totalorder %s118, %s120
      %p124 = scmp.eq.s32.totalorder %s21, 0
      %p125 = por %p123, %p124
      %p126 = scmp.ne.s32.totalorder %s118, %s120
      %p127 = scmp.eq.s32.totalorder %s26, 1
      %p128 = por %p126, %p127
      %p129 = scmp.ne.s32.totalorder %s120, %s121
      %p130 = scmp.eq.s32.totalorder %s26, 0
      %p131 = por %p129, %p130
      %p132 = scmp.ne.s32.totalorder %s120, %s121
      %p133 = scmp.eq.s32.totalorder %s27, 1
      %p134 = por %p132, %p133
      %p136 = scmp.ne.s32.totalorder %s121, %s135
      %p137 = scmp.eq.s32.totalorder %s27, 0
      %p138 = por %p136, %p137
      %s140 = sadd.s32 %s139, 1
      %p143 = scmp.eq.s32.totalorder %s21, 1
      %p144 = scmp.ne.s32.totalorder %s139, %s141
      %p145 = scmp.eq.s32.totalorder %s21, 0
      %p146 = por %p144, %p145
      %p147 = scmp.ne.s32.totalorder %s139, %s141
      %p148 = scmp.eq.s32.totalorder %s26, 1
      %p149 = por %p147, %p148
      %p150 = scmp.ne.s32.totalorder %s141, %s142
      %p151 = scmp.eq.s32.totalorder %s26, 0
      %p152 = por %p150, %p151
      %p153 = scmp.ne.s32.totalorder %s141, %s142
      %p154 = scmp.eq.s32.totalorder %s27, 1
      %p155 = por %p153, %p154
      %p157 = scmp.ne.s32.totalorder %s142, %s156
      %p158 = scmp.eq.s32.totalorder %s27, 0
      %p159 = por %p157, %p158
      %s161 = sadd.s32 %s160, 1
      %p164 = scmp.eq.s32.totalorder %s21, 1
      %p165 = scmp.ne.s32.totalorder %s160, %s162
      %p166 = scmp.eq.s32.totalorder %s21, 0
      %p167 = por %p165, %p166
      %p168 = scmp.ne.s32.totalorder %s160, %s162
      %p169 = scmp.eq.s32.totalorder %s26, 1
      %p170 = por %p168, %p169
      %p171 = scmp.ne.s32.totalorder %s162, %s163
      %p172 = scmp.eq.s32.totalorder %s26, 0
      %p173 = por %p171, %p172
      %p174 = scmp.ne.s32.totalorder %s162, %s163
      %p175 = scmp.eq.s32.totalorder %s27, 1
      %p176 = por %p174, %p175
      %p178 = scmp.ne.s32.totalorder %s163, %s177
      %p179 = scmp.eq.s32.totalorder %s27, 0
      %p180 = por %p178, %p179
      %s182 = sadd.s32 %s181, 1
      %p185 = scmp.eq.s32.totalorder %s21, 1
      %p186 = scmp.ne.s32.totalorder %s181, %s183
      %p187 = scmp.eq.s32.totalorder %s21, 0
      %p188 = por %p186, %p187
      %p189 = scmp.ne.s32.totalorder %s181, %s183
      %p190 = scmp.eq.s32.totalorder %s26, 1
      %p191 = por %p189, %p190
      %p192 = scmp.ne.s32.totalorder %s183, %s184
      %p193 = scmp.eq.s32.totalorder %s26, 0
      %p194 = por %p192, %p193
      %p195 = scmp.ne.s32.totalorder %s183, %s184
      %p196 = scmp.eq.s32.totalorder %s27, 1
      %p197 = por %p195, %p196
      %p199 = scmp.ne.s32.totalorder %s184, %s198
      %p200 = scmp.eq.s32.totalorder %s27, 0
      %p201 = por %p199, %p200
      %s203 = sadd.s32 %s202, 1
      %p206 = scmp.eq.s32.totalorder %s21, 1
      %p207 = scmp.ne.s32.totalorder %s202, %s204
      %p208 = scmp.eq.s32.totalorder %s21, 0
      %p209 = por %p207, %p208
      %p210 = scmp.ne.s32.totalorder %s202, %s204
      %p211 = scmp.eq.s32.totalorder %s26, 1
      %p212 = por %p210, %p211
      %p213 = scmp.ne.s32.totalorder %s204, %s205
      %p214 = scmp.eq.s32.totalorder %s26, 0
      %p215 = por %p213, %p214
      %p216 = scmp.ne.s32.totalorder %s204, %s205
      %p217 = scmp.eq.s32.totalorder %s27, 1
      %p218 = por %p216, %p217
      %p220 = scmp.ne.s32.totalorder %s205, %s219
      %p221 = scmp.eq.s32.totalorder %s27, 0
      %p222 = por %p220, %p221
      %s224 = sadd.s32 %s223, 1
      %p227 = scmp.eq.s32.totalorder %s21, 1
      %p228 = scmp.ne.s32.totalorder %s223, %s225
      %p229 = scmp.eq.s32.totalorder %s21, 0
      %p230 = por %p228, %p229
      %p231 = scmp.ne.s32.totalorder %s223, %s225
      %p232 = scmp.eq.s32.totalorder %s26, 1
      %p233 = por %p231, %p232
      %p234 = scmp.ne.s32.totalorder %s225, %s226
      %p235 = scmp.eq.s32.totalorder %s26, 0
      %p236 = por %p234, %p235
      %p237 = scmp.ne.s32.totalorder %s225, %s226
      %p238 = scmp.eq.s32.totalorder %s27, 1
      %p239 = por %p237, %p238
      %p241 = scmp.ne.s32.totalorder %s226, %s240
      %p242 = scmp.eq.s32.totalorder %s27, 0
      %p243 = por %p241, %p242
      %s245 = sadd.s32 %s244, 1
      %p248 = scmp.eq.s32.totalorder %s21, 1
      %p249 = scmp.ne.s32.totalorder %s244, %s246
      %p250 = scmp.eq.s32.totalorder %s21, 0
      %p251 = por %p249, %p250
      %p252 = scmp.ne.s32.totalorder %s244, %s246
      %p253 = scmp.eq.s32.totalorder %s26, 1
      %p254 = por %p252, %p253
      %p255 = scmp.ne.s32.totalorder %s246, %s247
      %p256 = scmp.eq.s32.totalorder %s26, 0
      %p257 = por %p255, %p256
      %p258 = scmp.ne.s32.totalorder %s246, %s247
      %p259 = scmp.eq.s32.totalorder %s27, 1
      %p260 = por %p258, %p259
      %p262 = scmp.ne.s32.totalorder %s247, %s261
      %p263 = scmp.eq.s32.totalorder %s27, 0
      %p264 = por %p262, %p263
      %s266 = sadd.s32 %s265, 1
      %p269 = scmp.eq.s32.totalorder %s21, 1
      %p270 = scmp.ne.s32.totalorder %s265, %s267
      %p271 = scmp.eq.s32.totalorder %s21, 0
      %p272 = por %p270, %p271
      %p273 = scmp.ne.s32.totalorder %s265, %s267
      %p274 = scmp.eq.s32.totalorder %s26, 1
      %p275 = por %p273, %p274
      %p276 = scmp.ne.s32.totalorder %s267, %s268
      %p277 = scmp.eq.s32.totalorder %s26, 0
      %p278 = por %p276, %p277
      %p279 = scmp.ne.s32.totalorder %s267, %s268
      %p280 = scmp.eq.s32.totalorder %s27, 1
      %p281 = por %p279, %p280
      %p283 = scmp.ne.s32.totalorder %s268, %s282
      %p284 = scmp.eq.s32.totalorder %s27, 0
      %p285 = por %p283, %p284
      %s286 = ssub.s32 %s21, %s28
      %p287 = scmp.eq.s32.totalorder %s286, 0
      %s289 = sadd.s32 %s288, 1
      %s290 = scalar_select %p287, %s288, %s289
      %p293 = pneg %p287
      %p294 = scmp.eq.s32.totalorder %s21, 1
      %p295 = por %p293, %p294
      %p296 = scmp.ne.s32.totalorder %s288, %s291
      %p297 = scmp.eq.s32.totalorder %s21, 0
      %p298 = por %p296, %p297
      %p299 = scmp.ne.s32.totalorder %s288, %s291
      %p300 = scmp.eq.s32.totalorder %s26, 1
      %p301 = por %p299, %p300
      %p302 = scmp.ne.s32.totalorder %s291, %s292
      %p303 = scmp.eq.s32.totalorder %s26, 0
      %p304 = por %p302, %p303
      %p305 = scmp.ne.s32.totalorder %s291, %s292
      %p306 = scmp.eq.s32.totalorder %s27, 1
      %p307 = por %p305, %p306
      %p309 = scmp.ne.s32.totalorder %s292, %s308
      %p310 = scmp.eq.s32.totalorder %s27, 0
      %p311 = por %p309, %p310
      %p312 = scmp.le.s32.totalorder 1, %s21
      %p313 = scmp.lt.s32.totalorder %s21, 3
      %p314 = pnand %p312, %p313
      %p315 = pneg %p314
      // Predicated region
      $region9: #{tpu_custom_call.1} parent=5 // pred_check
        _
      $region10: #{tpu_custom_call.1} parent=5 // pred_check_branch
        %317 = sbr.rel (%p314) target = $region12
      $region11: #{tpu_custom_call.1} parent=5 // pred_region
        %s318 = ssub.s32 %s21, 1
        // Predicated region
        $region13: #{tpu_custom_call.1} parent=11 // pred_check
          %p319 = pneg %p68
        $region14: #{tpu_custom_call.1} parent=11 // pred_check_branch
          %321 = sbr.rel (%p319) target = $region16
        $region15: #{tpu_custom_call.1} parent=11 // pred_region
          _
        $region16: #{tpu_custom_call.1} parent=11 // pred_fallthru
          _
        // Predicated region
        $region17: #{tpu_custom_call.1} parent=11 // pred_check
          %p322 = pneg %p89
        $region18: #{tpu_custom_call.1} parent=11 // pred_check_branch
          %324 = sbr.rel (%p322) target = $region20
        $region19: #{tpu_custom_call.1} parent=11 // pred_region
          _
        $region20: #{tpu_custom_call.1} parent=11 // pred_fallthru
          _
        // Predicated region
        $region21: #{tpu_custom_call.1} parent=11 // pred_check
          %p325 = pneg %p110
        $region22: #{tpu_custom_call.1} parent=11 // pred_check_branch
          %327 = sbr.rel (%p325) target = $region24
        $region23: #{tpu_custom_call.1} parent=11 // pred_region
          _
        $region24: #{tpu_custom_call.1} parent=11 // pred_fallthru
          _
        // Predicated region
        $region25: #{tpu_custom_call.1} parent=11 // pred_check
          %p328 = pneg %p131
        $region26: #{tpu_custom_call.1} parent=11 // pred_check_branch
          %330 = sbr.rel (%p328) target = $region28
        $region27: #{tpu_custom_call.1} parent=11 // pred_region
          _
        $region28: #{tpu_custom_call.1} parent=11 // pred_fallthru
          _
        // Predicated region
        $region29: #{tpu_custom_call.1} parent=11 // pred_check
          %p331 = pneg %p152
        $region30: #{tpu_custom_call.1} parent=11 // pred_check_branch
          %333 = sbr.rel (%p331) target = $region32
        $region31: #{tpu_custom_call.1} parent=11 // pred_region
          _
        $region32: #{tpu_custom_call.1} parent=11 // pred_fallthru
          _
        // Predicated region
        $region33: #{tpu_custom_call.1} parent=11 // pred_check
          %p334 = pneg %p173
        $region34: #{tpu_custom_call.1} parent=11 // pred_check_branch
          %336 = sbr.rel (%p334) target = $region36
        $region35: #{tpu_custom_call.1} parent=11 // pred_region
          _
        $region36: #{tpu_custom_call.1} parent=11 // pred_fallthru
          _
        // Predicated region
        $region37: #{tpu_custom_call.1} parent=11 // pred_check
          %p337 = pneg %p194
        $region38: #{tpu_custom_call.1} parent=11 // pred_check_branch
          %339 = sbr.rel (%p337) target = $region40
        $region39: #{tpu_custom_call.1} parent=11 // pred_region
          _
        $region40: #{tpu_custom_call.1} parent=11 // pred_fallthru
          _
        // Predicated region
        $region41: #{tpu_custom_call.1} parent=11 // pred_check
          %p340 = pneg %p215
        $region42: #{tpu_custom_call.1} parent=11 // pred_check_branch
          %342 = sbr.rel (%p340) target = $region44
        $region43: #{tpu_custom_call.1} parent=11 // pred_region
          _
        $region44: #{tpu_custom_call.1} parent=11 // pred_fallthru
          _
        // Predicated region
        $region45: #{tpu_custom_call.1} parent=11 // pred_check
          %p343 = pneg %p236
        $region46: #{tpu_custom_call.1} parent=11 // pred_check_branch
          %345 = sbr.rel (%p343) target = $region48
        $region47: #{tpu_custom_call.1} parent=11 // pred_region
          _
        $region48: #{tpu_custom_call.1} parent=11 // pred_fallthru
          _
        // Predicated region
        $region49: #{tpu_custom_call.1} parent=11 // pred_check
          %p346 = pneg %p257
        $region50: #{tpu_custom_call.1} parent=11 // pred_check_branch
          %348 = sbr.rel (%p346) target = $region52
        $region51: #{tpu_custom_call.1} parent=11 // pred_region
          _
        $region52: #{tpu_custom_call.1} parent=11 // pred_fallthru
          _
        // Predicated region
        $region53: #{tpu_custom_call.1} parent=11 // pred_check
          %p349 = pneg %p278
        $region54: #{tpu_custom_call.1} parent=11 // pred_check_branch
          %351 = sbr.rel (%p349) target = $region56
        $region55: #{tpu_custom_call.1} parent=11 // pred_region
          _
        $region56: #{tpu_custom_call.1} parent=11 // pred_fallthru
          _
      $region12: #{tpu_custom_call.1} parent=5 // pred_fallthru
        _
      %p352 = scmp.lt.s32.totalorder %s21, 2
      // Predicated region
      $region57: #{tpu_custom_call.1} parent=5 // pred_check
        %p353 = pneg %p352
      $region58: #{tpu_custom_call.1} parent=5 // pred_check_branch
        %355 = sbr.rel (%p353) target = $region60
      $region59: #{tpu_custom_call.1} parent=5 // pred_region
        // Predicated region
        $region61: #{tpu_custom_call.1} parent=59 // pred_check
          %p356 = pneg %p41
        $region62: #{tpu_custom_call.1} parent=59 // pred_check_branch
          %358 = sbr.rel (%p356) target = $region64
        $region63: #{tpu_custom_call.1} parent=59 // pred_region
          %p359 = scmp.lt.s32.totalorder %s21, 1
          %s360 = scalar_select %p359, %s21, 1
          %s361 = smul.addr %s360, 2
          %s362 = smul.addr %s361, 8
          %s363 = scalar_lea.vmem %s0, %s362
        $region64: #{tpu_custom_call.1} parent=59 // pred_fallthru
          _
      $region60: #{tpu_custom_call.1} parent=5 // pred_fallthru
        _
      %p364 = scmp.le.s32.totalorder 1, %s21
      %p365 = scmp.lt.s32.totalorder %s21, 3
      %p366 = pnand %p364, %p365
      %p367 = pneg %p366
      // Predicated region
      $region65: #{tpu_custom_call.1} parent=5 // pred_check
        _
      $region66: #{tpu_custom_call.1} parent=5 // pred_check_branch
        %369 = sbr.rel (%p366) target = $region68
      $region67: #{tpu_custom_call.1} parent=5 // pred_region
        %s370 = ssub.s32 %s21, 1
        %p371 = scmp.lt.s32.totalorder %s26, 1
        %s372 = scalar_select %p371, %s26, 1
        %s373 = smul.addr %s372, 2
        %s374 = smul.addr %s373, 8
        %s375 = scalar_lea.vmem %s0, %s374
        %p376 = pneg %p47
        %p377 = pneg %p44
        %p378 = pneg %p68
        %p379 = pneg %p65
        %p380 = pneg %p89
        %p381 = pneg %p86
        %p382 = pneg %p110
        %p383 = pneg %p107
        %p384 = pneg %p131
        %p385 = pneg %p128
        %p386 = pneg %p152
        %p387 = pneg %p149
        %p388 = pneg %p173
        %p389 = pneg %p170
        %p390 = pneg %p194
        %p391 = pneg %p191
        %p392 = pneg %p215
        %p393 = pneg %p212
        %p394 = pneg %p236
        %p395 = pneg %p233
        %p396 = pneg %p257
        %p397 = pneg %p254
        %p398 = pneg %p278
        %p399 = pneg %p275
        %p400 = pneg %p304
        %p401 = pneg %p301
        %s402 = sand.u32 %s291, 1
        %s403 = scalar_lea.sflag [#allocation4], %s402
        %s404 = sand.u32 %s291, 1
        %s405 = smul.addr %s404, 16
        %s406 = scalar_lea.vmem [#allocation3], %s405
        %p407 = scmp.lt.s32.totalorder %s26, 1
        %s408 = scalar_select %p407, %s26, 1
        %s409 = smul.addr %s408, 2
        %s410 = smul.addr %s409, 8
        %s411 = scalar_lea.vmem %s0, %s410
        %v413 = vld [vmem:[%s411] sm:$0xff]
        %v414 = vld [vmem:[%s411 + $0x8] sm:$0xff]
        %v415 = vld [vmem:[%s1] sm:$0x1]
        %v416 = vld [vmem:[%s2] sm:$0x1]
        %vm417 = vcmask 261120
        %v418 = vsel %vm417, %v413, 0.0
        %419 = vadd.xlane.f32.xlu0 %v418
        %v420 = vpop.xlane.xlu0 %419
        %v421 = vsel %vm417, %v414, 0.0
        %422 = vadd.xlane.f32.xlu0 %v421
        %v423 = vpop.xlane.xlu0 %422
        %v424 = vrcp.pop 32.0
        %v425 = vmul.f32 %v420, %v424
        %v426 = vmul.f32 %v423, %v424
        %v427 = vsub.f32 %v413, %v425
        %v428 = vsub.f32 %v414, %v426
        %v429 = vmul.f32 %v427, %v427
        %v430 = vmul.f32 %v428, %v428
        %v431 = vsel %vm417, %v429, 0.0
        %432 = vadd.xlane.f32.xlu0 %v431
        %v433 = vpop.xlane.xlu0 %432
        %v434 = vsel %vm417, %v430, 0.0
        %435 = vadd.xlane.f32.xlu0 %v434
        %v436 = vpop.xlane.xlu0 %435
        %v437 = vmul.f32 %v433, %v424
        %v438 = vmul.f32 %v436, %v424
        %v439 = vadd.f32 %v437, 1e-05
        %v440 = vadd.f32 %v438, 1e-05
        %v441 = vrsqrt.pop %v439
        %v442 = vrsqrt.pop %v440
        %v443 = vmul.f32 %v427, %v441
        %v444 = vmul.f32 %v428, %v442
        %v446 = vlaneseq
        %v447 = vshrl.u32 %v446, 7
        %v448 = vsub.s32 0, %v447
        %v449 = vrot.slane %v415, %v448
        %v451 = vmul.f32 %v443, %v449
        %v452 = vmul.f32 %v444, %v449
        %v454 = vlaneseq
        %v455 = vshrl.u32 %v454, 7
        %v456 = vsub.s32 0, %v455
        %v457 = vrot.slane %v416, %v456
        %v459 = vadd.f32 %v451, %v457
        %v460 = vadd.f32 %v452, %v457
        %v461 = vsel %vm417, %v459, 0.0
        %462 = vadd.xlane.f32.xlu0 %v461
        %v463 = vpop.xlane.xlu0 %462
        %v464 = vsel %vm417, %v460, 0.0
        %465 = vadd.xlane.f32.xlu0 %v464
        %v466 = vpop.xlane.xlu0 %465
        %v467 = vmul.f32 %v463, %v424
        %v468 = vmul.f32 %v466, %v424
        %469 = vxpose.xlu0.b32.start [1/16] %v467, 128
        %470 = vxpose.xlu0.b32.cont [2/16] %v468, 128
        %471 = vxpose.xlu0.b32.cont [3/16] 0.0, 128
        %472 = vxpose.xlu0.b32.cont [4/16] 0.0, 128
        %473 = vxpose.xlu0.b32.cont [5/16] 0.0, 128
        %474 = vxpose.xlu0.b32.cont [6/16] 0.0, 128
        %475 = vxpose.xlu0.b32.cont [7/16] 0.0, 128
        %476 = vxpose.xlu0.b32.cont [8/16] 0.0, 128
        %477 = vxpose.xlu0.b32.cont [9/16] 0.0, 128
        %478 = vxpose.xlu0.b32.cont [10/16] 0.0, 128
        %479 = vxpose.xlu0.b32.cont [11/16] 0.0, 128
        %480 = vxpose.xlu0.b32.cont [12/16] 0.0, 128
        %481 = vxpose.xlu0.b32.cont [13/16] 0.0, 128
        %482 = vxpose.xlu0.b32.cont [14/16] 0.0, 128
        %483 = vxpose.xlu0.b32.cont [15/16] 0.0, 128
        %484 = vxpose.xlu0.b32.end [16/16] 0.0, 128
        %v485 = vpop.trf.xlu0
        %v486 = vpop.trf.xlu0
        %v487 = vpop.trf.xlu0
        %v488 = vpop.trf.xlu0
        %v489 = vpop.trf.xlu0
        %v490 = vpop.trf.xlu0
        %v491 = vpop.trf.xlu0
        %v492 = vpop.trf.xlu0
        %v493 = vpop.trf.xlu0
        %v494 = vpop.trf.xlu0
        %v495 = vpop.trf.xlu0
        %v496 = vpop.trf.xlu0
        %v497 = vpop.trf.xlu0
        %v498 = vpop.trf.xlu0
        %v499 = vpop.trf.xlu0
        %v500 = vpop.trf.xlu0
        %v501 = vlaneseq
        %v502 = vshrl.u32 %v501, 7
        %v503 = vsub.s32 0, %v502
        %v504 = vrot.slane %v485, %v503
        %v505 = vsub.f32 %v504, %v467
        %v506 = vsub.f32 %v504, %v468
        %v507 = vxor.u32 %v505, 2147483648
        %v508 = vxor.u32 %v506, 2147483648
        %v509 = vmul.f32 %v507, 1.442695
        %v510 = vpow.pop %v509
        %v511 = vmul.f32 %v508, 1.442695
        %v512 = vpow.pop %v511
        %v513 = vadd.f32 %v510, 1.0
        %v514 = vadd.f32 %v512, 1.0
        %v515 = vrcp.pop %v513
        %v516 = vmul.f32 1.0, %v515
        %v517 = vrcp.pop %v514
        %v518 = vmul.f32 1.0, %v517
        %v519 = vsub.f32 %v516, 0.5
        %v520 = vsub.f32 %v518, 0.5
        %v521 = vand.u32 2147483647, %v519
        %v522 = vand.u32 2147483647, %v520
        %v523 = vsub.f32 %v521, 0.5
        %v524 = vsub.f32 %v522, 0.5
        %v525 = vand.u32 2147483647, %v523
        %v526 = vand.u32 2147483647, %v524
        %v527 = vmul.f32 %v525, 2.0
        %v528 = vmul.f32 %v526, 2.0
        %v529 = vld [vmem:[%s3] sm:$0xff]
        %v530 = vld [vmem:[%s3 + $0x8] sm:$0xff]
        %v531 = vmul.f32 %v529, %v527
        %v532 = vmul.f32 %v530, %v528
        %v533 = vpack.c.bf16 %v460, %v459
        %v534 = vpack.c.bf16 %v532, %v531
        %535 = vxpose.xlu0.c.b16.start [1/8] %v533, 128
        %536 = vxpose.xlu0.c.b16.cont [2/8] 0, 128
        %537 = vxpose.xlu0.c.b16.cont [3/8] 0, 128
        %538 = vxpose.xlu0.c.b16.cont [4/8] 0, 128
        %539 = vxpose.xlu0.c.b16.cont [5/8] 0, 128
        %540 = vxpose.xlu0.c.b16.cont [6/8] 0, 128
        %541 = vxpose.xlu0.c.b16.cont [7/8] 0, 128
        %542 = vxpose.xlu0.c.b16.end [8/8] 0, 128
        %v543 = vpop.trf.xlu0
        %v544 = vpop.trf.xlu0
        %v545 = vpop.trf.xlu0
        %v546 = vpop.trf.xlu0
        %v547 = vpop.trf.xlu0
        %v548 = vpop.trf.xlu0
        %v549 = vpop.trf.xlu0
        %v550 = vpop.trf.xlu0
        %vm551 = vcmask 130048
        %v553 = vsel %vm551, %v543, 0
        %v556 = vsel %vm551, %v544, 0
        %558 = vmatprep.subr.bf16.mxu0 0
        %559 = vmatpush1.bf16.msra.mxu0 %v534
        %560 = vmatprep.subr.bf16.mxu0 0
        %561 = vmatpush1.bf16.msra.mxu0 0
        %562 = vmatprep.subr.bf16.mxu0 0
        %563 = vmatpush1.bf16.msra.mxu0 0
        %564 = vmatprep.subr.bf16.mxu0 0
        %565 = vmatpush1.bf16.msra.mxu0 0
        %566 = vmatprep.subr.bf16.mxu0 0
        %567 = vmatpush1.bf16.msra.mxu0 0
        %568 = vmatprep.subr.bf16.mxu0 0
        %569 = vmatpush1.bf16.msra.mxu0 0
        %570 = vmatprep.subr.bf16.mxu0 0
        %571 = vmatpush1.bf16.msra.mxu0 0
        %572 = vmatprep.subr.bf16.mxu0 0
        %573 = vmatpush1.bf16.msra.mxu0 0
        %574 = vmatprep.subr.bf16.mxu0 0
        %575 = vmatpush1.bf16.msra.mxu0 0
        %576 = vmatprep.subr.bf16.mxu0 0
        %577 = vmatpush1.bf16.msra.mxu0 0
        %578 = vmatprep.subr.bf16.mxu0 0
        %579 = vmatpush1.bf16.msra.mxu0 0
        %580 = vmatprep.subr.bf16.mxu0 0
        %581 = vmatpush1.bf16.msra.mxu0 0
        %582 = vmatprep.subr.bf16.mxu0 0
        %583 = vmatpush1.bf16.msra.mxu0 0
        %584 = vmatprep.subr.bf16.mxu0 0
        %585 = vmatpush1.bf16.msra.mxu0 0
        %586 = vmatprep.subr.bf16.mxu0 0
        %587 = vmatpush1.bf16.msra.mxu0 0
        %588 = vmatprep.subr.bf16.mxu0 0
        %589 = vmatpush1.bf16.msra.mxu0 0
        %590 = vmatprep.mubr.bf16.mxu0 0
        %591 = vmatmul.mubr.bf16.gmra.mrb[0].mxu0 %v553
        %v592 = vpop.f32.mrb[0].mxu0
        %v593 = vadd.f32 0.0, %v592
        %v594 = vpop.f32.mrb[0].mxu0
        %v595 = vpop.f32.mrb[0].mxu0
        %v596 = vadd.f32 0.0, %v595
        %v597 = vpop.f32.mrb[0].mxu0
        %598 = vmatprep.mubr.bf16.mxu0 0
        %599 = vmatmul.mubr.bf16.gmra.mrb[0].mxu0 %v556
        %v600 = vpop.f32.mrb[0].mxu0
        %v601 = vadd.f32 0.0, %v600
        %v602 = vpop.f32.mrb[0].mxu0
        %v603 = vpop.f32.mrb[0].mxu0
        %v604 = vadd.f32 0.0, %v603
        %v605 = vpop.f32.mrb[0].mxu0
        %606 = vdwg.mxu0
        %v607 = vld [vmem:[%s4] sm:$0xff]
        %v608 = vld [vmem:[%s4 + $0x8] sm:$0xff]
        %v609 = vld [vmem:[%s4 + $0x10] sm:$0xff]
        %v610 = vld [vmem:[%s4 + $0x18] sm:$0xff]
        %v611 = vmul.f32 %v593, %v607
        %v612 = vmul.f32 %v596, %v608
        %v613 = vmul.f32 %v601, %v609
        %v614 = vmul.f32 %v604, %v610
        %v615 = vmax.f32 %v611, 0.0
        %v616 = vmax.f32 %v612, 0.0
        %v617 = vmax.f32 %v613, 0.0
        %v618 = vmax.f32 %v614, 0.0
        %619 = vst.msk [vmem:[#allocation2] sm:$0xff] %vm551, %v615
        %620 = vst.msk [vmem:[#allocation2 + $0x8] sm:$0xff] %vm551, %v616
        %621 = vst.msk [vmem:[#allocation2 + $0x10] sm:$0xff] %vm551, %v617
        %622 = vst.msk [vmem:[#allocation2 + $0x18] sm:$0xff] %vm551, %v618
        %v623 = vld [vmem:[#allocation2] ss:$2 sm:$0xff]
        %s624 = scalar_lea.vmem [#allocation2], 16
        %v625 = vld [vmem:[%s624] ss:$2 sm:$0xff]
        %s626 = scalar_lea.vmem [#allocation2], 1
        %v627 = vld [vmem:[%s626] ss:$2 sm:$0xff]
        %s628 = scalar_lea.vmem [#allocation2], 17
        %v629 = vld [vmem:[%s628] ss:$2 sm:$0xff]
        %632 = vrot.lane.b32.xlu0 %v627, 16
        %v633 = vpop.permute.xlu0 %632
        %634 = vrot.lane.b32.xlu0 %v629, 16
        %v635 = vpop.permute.xlu0 %634
        %v638 = vsel %vm551, %v623, %v633
        %v639 = vsel %vm551, %v625, %v635
        %v640 = vld [vmem:[%s5] sm:$0xff]
        %v641 = vld [vmem:[%s5 + $0x8] sm:$0xff]
        %v642 = vld [vmem:[%s5 + $0x10] sm:$0xff]
        %v643 = vld [vmem:[%s5 + $0x18] sm:$0xff]
        %v644 = vpack.c.bf16 %v641, %v640
        %v645 = vpack.c.bf16 %v643, %v642
        %v647 = vsel %vm417, %v533, 0
        %649 = vmatprep.subr.bf16.mxu0 0
        %650 = vmatpush1.bf16.msra.mxu0 %v644
        %651 = vmatprep.subr.bf16.mxu0 0
        %652 = vmatpush1.bf16.msra.mxu0 %v645
        %653 = vmatprep.subr.bf16.mxu0 0
        %654 = vmatpush1.bf16.msra.mxu0 0
        %655 = vmatprep.subr.bf16.mxu0 0
        %656 = vmatpush1.bf16.msra.mxu0 0
        %657 = vmatprep.subr.bf16.mxu0 0
        %658 = vmatpush1.bf16.msra.mxu0 0
        %659 = vmatprep.subr.bf16.mxu0 0
        %660 = vmatpush1.bf16.msra.mxu0 0
        %661 = vmatprep.subr.bf16.mxu0 0
        %662 = vmatpush1.bf16.msra.mxu0 0
        %663 = vmatprep.subr.bf16.mxu0 0
        %664 = vmatpush1.bf16.msra.mxu0 0
        %665 = vmatprep.subr.bf16.mxu0 0
        %666 = vmatpush1.bf16.msra.mxu0 0
        %667 = vmatprep.subr.bf16.mxu0 0
        %668 = vmatpush1.bf16.msra.mxu0 0
        %669 = vmatprep.subr.bf16.mxu0 0
        %670 = vmatpush1.bf16.msra.mxu0 0
        %671 = vmatprep.subr.bf16.mxu0 0
        %672 = vmatpush1.bf16.msra.mxu0 0
        %673 = vmatprep.subr.bf16.mxu0 0
        %674 = vmatpush1.bf16.msra.mxu0 0
        %675 = vmatprep.subr.bf16.mxu0 0
        %676 = vmatpush1.bf16.msra.mxu0 0
        %677 = vmatprep.subr.bf16.mxu0 0
        %678 = vmatpush1.bf16.msra.mxu0 0
        %679 = vmatprep.subr.bf16.mxu0 0
        %680 = vmatpush1.bf16.msra.mxu0 0
        %681 = vmatprep.mubr.bf16.mxu0 0
        %682 = vmatmul.mubr.bf16.gmra.mrb[0].mxu0 %v647
        %v683 = vpop.f32.mrb[0].mxu0
        %v684 = vadd.f32 0.0, %v683
        %v685 = vpop.f32.mrb[0].mxu0
        %v686 = vpop.f32.mrb[0].mxu0
        %v687 = vadd.f32 0.0, %v686
        %v688 = vpop.f32.mrb[0].mxu0
        %689 = vdwg.mxu0
        %v690 = vpack.c.bf16 %v639, %v638
        %v691 = vpack.c.bf16 %v687, %v684
        %vm692 = vcmask 64512
        %v694 = vsel %vm692, %v690, 0
        %v697 = vsel %vm692, %v691, 0
        %699 = vmatprep.subr.bf16.mxu0 0
        %700 = vmatpush1.bf16.xpose.msra.mxu0 %v697
        %701 = vmatprep.subr.bf16.mxu0 0
        %702 = vmatpush1.bf16.xpose.msra.mxu0 0
        %703 = vmatprep.subr.bf16.mxu0 0
        %704 = vmatpush1.bf16.xpose.msra.mxu0 0
        %705 = vmatprep.subr.bf16.mxu0 0
        %706 = vmatpush1.bf16.xpose.msra.mxu0 0
        %707 = vmatprep.subr.bf16.mxu0 0
        %708 = vmatpush1.bf16.xpose.msra.mxu0 0
        %709 = vmatprep.subr.bf16.mxu0 0
        %710 = vmatpush1.bf16.xpose.msra.mxu0 0
        %711 = vmatprep.subr.bf16.mxu0 0
        %712 = vmatpush1.bf16.xpose.msra.mxu0 0
        %713 = vmatprep.subr.bf16.mxu0 0
        %714 = vmatpush1.bf16.xpose.msra.mxu0 0
        %715 = vmatprep.subr.bf16.mxu0 0
        %716 = vmatpush1.bf16.xpose.msra.mxu0 0
        %717 = vmatprep.subr.bf16.mxu0 0
        %718 = vmatpush1.bf16.xpose.msra.mxu0 0
        %719 = vmatprep.subr.bf16.mxu0 0
        %720 = vmatpush1.bf16.xpose.msra.mxu0 0
        %721 = vmatprep.subr.bf16.mxu0 0
        %722 = vmatpush1.bf16.xpose.msra.mxu0 0
        %723 = vmatprep.subr.bf16.mxu0 0
        %724 = vmatpush1.bf16.xpose.msra.mxu0 0
        %725 = vmatprep.subr.bf16.mxu0 0
        %726 = vmatpush1.bf16.xpose.msra.mxu0 0
        %727 = vmatprep.subr.bf16.mxu0 0
        %728 = vmatpush1.bf16.xpose.msra.mxu0 0
        %729 = vmatprep.subr.bf16.mxu0 0
        %730 = vmatpush1.bf16.xpose.msra.mxu0 0
        %731 = vmatprep.mubr.bf16.mxu0 0
        %732 = vmatmul.mubr.bf16.gmra.mrb[0].mxu0 %v694
        %v733 = vpop.f32.mrb[0].mxu0
        %v734 = vadd.f32 0.0, %v733
        %v735 = vpop.f32.mrb[0].mxu0
        %v736 = vpop.f32.mrb[0].mxu0
        %v737 = vadd.f32 0.0, %v736
        %v738 = vpop.f32.mrb[0].mxu0
        %739 = vdwg.mxu0
        %v740 = vmul.f32 %v734, 0.35355362
        %v741 = vmul.f32 %v737, 0.35355362
        %v742 = vsel %vm551, %v740, -inf
        %743 = vmax.xlane.f32.xlu0 %v742
        %v744 = vpop.xlane.xlu0 %743
        %v745 = vsel %vm551, %v741, -inf
        %746 = vmax.xlane.f32.xlu0 %v745
        %v747 = vpop.xlane.xlu0 %746
        %v748 = vsub.f32 %v740, %v744
        %v749 = vsub.f32 %v741, %v747
        %v750 = vmul.f32 %v748, 1.442695
        %v751 = vpow.pop %v750
        %v752 = vmul.f32 %v749, 1.442695
        %v753 = vpow.pop %v752
        %v754 = vsel %vm551, %v751, 0.0
        %755 = vadd.xlane.f32.xlu0 %v754
        %v756 = vpop.xlane.xlu0 %755
        %v757 = vsel %vm551, %v753, 0.0
        %758 = vadd.xlane.f32.xlu0 %v757
        %v759 = vpop.xlane.xlu0 %758
        %v760 = vrcp.pop %v756
        %v761 = vrcp.pop %v759
        %v762 = vmul.f32 %v751, %v760
        %v763 = vmul.f32 %v753, %v761
        %v764 = vpack.c.bf16 %v763, %v762
        %766 = vrot.lane.b32.xlu0 %v691, 96
        %v767 = vpop.permute.xlu0 %766
        %v770 = vsel %vm551, %v764, 0
        %772 = vmatprep.subr.bf16.mxu0 0
        %773 = vmatpush1.bf16.msra.mxu0 %v767
        %774 = vmatprep.subr.bf16.mxu0 0
        %775 = vmatpush1.bf16.msra.mxu0 0
        %776 = vmatprep.subr.bf16.mxu0 0
        %777 = vmatpush1.bf16.msra.mxu0 0
        %778 = vmatprep.subr.bf16.mxu0 0
        %779 = vmatpush1.bf16.msra.mxu0 0
        %780 = vmatprep.subr.bf16.mxu0 0
        %781 = vmatpush1.bf16.msra.mxu0 0
        %782 = vmatprep.subr.bf16.mxu0 0
        %783 = vmatpush1.bf16.msra.mxu0 0
        %784 = vmatprep.subr.bf16.mxu0 0
        %785 = vmatpush1.bf16.msra.mxu0 0
        %786 = vmatprep.subr.bf16.mxu0 0
        %787 = vmatpush1.bf16.msra.mxu0 0
        %788 = vmatprep.subr.bf16.mxu0 0
        %789 = vmatpush1.bf16.msra.mxu0 0
        %790 = vmatprep.subr.bf16.mxu0 0
        %791 = vmatpush1.bf16.msra.mxu0 0
        %792 = vmatprep.subr.bf16.mxu0 0
        %793 = vmatpush1.bf16.msra.mxu0 0
        %794 = vmatprep.subr.bf16.mxu0 0
        %795 = vmatpush1.bf16.msra.mxu0 0
        %796 = vmatprep.subr.bf16.mxu0 0
        %797 = vmatpush1.bf16.msra.mxu0 0
        %798 = vmatprep.subr.bf16.mxu0 0
        %799 = vmatpush1.bf16.msra.mxu0 0
        %800 = vmatprep.subr.bf16.mxu0 0
        %801 = vmatpush1.bf16.msra.mxu0 0
        %802 = vmatprep.subr.bf16.mxu0 0
        %803 = vmatpush1.bf16.msra.mxu0 0
        %804 = vmatprep.mubr.bf16.mxu0 0
        %805 = vmatmul.mubr.bf16.gmra.mrb[0].mxu0 %v770
        %v806 = vpop.f32.mrb[0].mxu0
        %v807 = vadd.f32 0.0, %v806
        %v808 = vpop.f32.mrb[0].mxu0
        %v809 = vpop.f32.mrb[0].mxu0
        %v810 = vadd.f32 0.0, %v809
        %v811 = vpop.f32.mrb[0].mxu0
        %812 = vdwg.mxu0
        %814 = vrot.lane.b32.xlu0 %v690, 120
        %v815 = vpop.permute.xlu0 %814
        %816 = vrot.lane.b32.xlu0 %v691, 120
        %v817 = vpop.permute.xlu0 %816
        %v819 = vsel %vm692, %v815, 0
        %v822 = vsel %vm692, %v817, 0
        %824 = vmatprep.subr.bf16.mxu0 0
        %825 = vmatpush1.bf16.xpose.msra.mxu0 %v822
        %826 = vmatprep.subr.bf16.mxu0 0
        %827 = vmatpush1.bf16.xpose.msra.mxu0 0
        %828 = vmatprep.subr.bf16.mxu0 0
        %829 = vmatpush1.bf16.xpose.msra.mxu0 0
        %830 = vmatprep.subr.bf16.mxu0 0
        %831 = vmatpush1.bf16.xpose.msra.mxu0 0
        %832 = vmatprep.subr.bf16.mxu0 0
        %833 = vmatpush1.bf16.xpose.msra.mxu0 0
        %834 = vmatprep.subr.bf16.mxu0 0
        %835 = vmatpush1.bf16.xpose.msra.mxu0 0
        %836 = vmatprep.subr.bf16.mxu0 0
        %837 = vmatpush1.bf16.xpose.msra.mxu0 0
        %838 = vmatprep.subr.bf16.mxu0 0
        %839 = vmatpush1.bf16.xpose.msra.mxu0 0
        %840 = vmatprep.subr.bf16.mxu0 0
        %841 = vmatpush1.bf16.xpose.msra.mxu0 0
        %842 = vmatprep.subr.bf16.mxu0 0
        %843 = vmatpush1.bf16.xpose.msra.mxu0 0
        %844 = vmatprep.subr.bf16.mxu0 0
        %845 = vmatpush1.bf16.xpose.msra.mxu0 0
        %846 = vmatprep.subr.bf16.mxu0 0
        %847 = vmatpush1.bf16.xpose.msra.mxu0 0
        %848 = vmatprep.subr.bf16.mxu0 0
        %849 = vmatpush1.bf16.xpose.msra.mxu0 0
        %850 = vmatprep.subr.bf16.mxu0 0
        %851 = vmatpush1.bf16.xpose.msra.mxu0 0
        %852 = vmatprep.subr.bf16.mxu0 0
        %853 = vmatpush1.bf16.xpose.msra.mxu0 0
        %854 = vmatprep.subr.bf16.mxu0 0
        %855 = vmatpush1.bf16.xpose.msra.mxu0 0
        %856 = vmatprep.mubr.bf16.mxu0 0
        %857 = vmatmul.mubr.bf16.gmra.mrb[0].mxu0 %v819
        %v858 = vpop.f32.mrb[0].mxu0
        %v859 = vadd.f32 0.0, %v858
        %v860 = vpop.f32.mrb[0].mxu0
        %v861 = vpop.f32.mrb[0].mxu0
        %v862 = vadd.f32 0.0, %v861
        %v863 = vpop.f32.mrb[0].mxu0
        %864 = vdwg.mxu0
        %v865 = vmul.f32 %v859, 0.35355362
        %v866 = vmul.f32 %v862, 0.35355362
        %v867 = vsel %vm551, %v865, -inf
        %868 = vmax.xlane.f32.xlu0 %v867
        %v869 = vpop.xlane.xlu0 %868
        %v870 = vsel %vm551, %v866, -inf
        %871 = vmax.xlane.f32.xlu0 %v870
        %v872 = vpop.xlane.xlu0 %871
        %v873 = vsub.f32 %v865, %v869
        %v874 = vsub.f32 %v866, %v872
        %v875 = vmul.f32 %v873, 1.442695
        %v876 = vpow.pop %v875
        %v877 = vmul.f32 %v874, 1.442695
        %v878 = vpow.pop %v877
        %v879 = vsel %vm551, %v876, 0.0
        %880 = vadd.xlane.f32.xlu0 %v879
        %v881 = vpop.xlane.xlu0 %880
        %v882 = vsel %vm551, %v878, 0.0
        %883 = vadd.xlane.f32.xlu0 %v882
        %v884 = vpop.xlane.xlu0 %883
        %v885 = vrcp.pop %v881
        %v886 = vrcp.pop %v884
        %v887 = vmul.f32 %v876, %v885
        %v888 = vmul.f32 %v878, %v886
        %v889 = vpack.c.bf16 %v888, %v887
        %890 = vrot.lane.b32.xlu0 %v691, 88
        %v891 = vpop.permute.xlu0 %890
        %v894 = vsel %vm551, %v889, 0
        %896 = vmatprep.subr.bf16.mxu0 0
        %897 = vmatpush1.bf16.msra.mxu0 %v891
        %898 = vmatprep.subr.bf16.mxu0 0
        %899 = vmatpush1.bf16.msra.mxu0 0
        %900 = vmatprep.subr.bf16.mxu0 0
        %901 = vmatpush1.bf16.msra.mxu0 0
        %902 = vmatprep.subr.bf16.mxu0 0
        %903 = vmatpush1.bf16.msra.mxu0 0
        %904 = vmatprep.subr.bf16.mxu0 0
        %905 = vmatpush1.bf16.msra.mxu0 0
        %906 = vmatprep.subr.bf16.mxu0 0
        %907 = vmatpush1.bf16.msra.mxu0 0
        %908 = vmatprep.subr.bf16.mxu0 0
        %909 = vmatpush1.bf16.msra.mxu0 0
        %910 = vmatprep.subr.bf16.mxu0 0
        %911 = vmatpush1.bf16.msra.mxu0 0
        %912 = vmatprep.subr.bf16.mxu0 0
        %913 = vmatpush1.bf16.msra.mxu0 0
        %914 = vmatprep.subr.bf16.mxu0 0
        %915 = vmatpush1.bf16.msra.mxu0 0
        %916 = vmatprep.subr.bf16.mxu0 0
        %917 = vmatpush1.bf16.msra.mxu0 0
        %918 = vmatprep.subr.bf16.mxu0 0
        %919 = vmatpush1.bf16.msra.mxu0 0
        %920 = vmatprep.subr.bf16.mxu0 0
        %921 = vmatpush1.bf16.msra.mxu0 0
        %922 = vmatprep.subr.bf16.mxu0 0
        %923 = vmatpush1.bf16.msra.mxu0 0
        %924 = vmatprep.subr.bf16.mxu0 0
        %925 = vmatpush1.bf16.msra.mxu0 0
        %926 = vmatprep.subr.bf16.mxu0 0
        %927 = vmatpush1.bf16.msra.mxu0 0
        %928 = vmatprep.mubr.bf16.mxu0 0
        %929 = vmatmul.mubr.bf16.gmra.mrb[0].mxu0 %v894
        %v930 = vpop.f32.mrb[0].mxu0
        %v931 = vadd.f32 0.0, %v930
        %v932 = vpop.f32.mrb[0].mxu0
        %v933 = vpop.f32.mrb[0].mxu0
        %v934 = vadd.f32 0.0, %v933
        %v935 = vpop.f32.mrb[0].mxu0
        %936 = vdwg.mxu0
        %937 = vrot.lane.b32.xlu0 %v690, 112
        %v938 = vpop.permute.xlu0 %937
        %939 = vrot.lane.b32.xlu0 %v691, 112
        %v940 = vpop.permute.xlu0 %939
        %v942 = vsel %vm692, %v938, 0
        %v945 = vsel %vm692, %v940, 0
        %947 = vmatprep.subr.bf16.mxu0 0
        %948 = vmatpush1.bf16.xpose.msra.mxu0 %v945
        %949 = vmatprep.subr.bf16.mxu0 0
        %950 = vmatpush1.bf16.xpose.msra.mxu0 0
        %951 = vmatprep.subr.bf16.mxu0 0
        %952 = vmatpush1.bf16.xpose.msra.mxu0 0
        %953 = vmatprep.subr.bf16.mxu0 0
        %954 = vmatpush1.bf16.xpose.msra.mxu0 0
        %955 = vmatprep.subr.bf16.mxu0 0
        %956 = vmatpush1.bf16.xpose.msra.mxu0 0
        %957 = vmatprep.subr.bf16.mxu0 0
        %958 = vmatpush1.bf16.xpose.msra.mxu0 0
        %959 = vmatprep.subr.bf16.mxu0 0
        %960 = vmatpush1.bf16.xpose.msra.mxu0 0
        %961 = vmatprep.subr.bf16.mxu0 0
        %962 = vmatpush1.bf16.xpose.msra.mxu0 0
        %963 = vmatprep.subr.bf16.mxu0 0
        %964 = vmatpush1.bf16.xpose.msra.mxu0 0
        %965 = vmatprep.subr.bf16.mxu0 0
        %966 = vmatpush1.bf16.xpose.msra.mxu0 0
        %967 = vmatprep.subr.bf16.mxu0 0
        %968 = vmatpush1.bf16.xpose.msra.mxu0 0
        %969 = vmatprep.subr.bf16.mxu0 0
        %970 = vmatpush1.bf16.xpose.msra.mxu0 0
        %971 = vmatprep.subr.bf16.mxu0 0
        %972 = vmatpush1.bf16.xpose.msra.mxu0 0
        %973 = vmatprep.subr.bf16.mxu0 0
        %974 = vmatpush1.bf16.xpose.msra.mxu0 0
        %975 = vmatprep.subr.bf16.mxu0 0
        %976 = vmatpush1.bf16.xpose.msra.mxu0 0
        %977 = vmatprep.subr.bf16.mxu0 0
        %978 = vmatpush1.bf16.xpose.msra.mxu0 0
        %979 = vmatprep.mubr.bf16.mxu0 0
        %980 = vmatmul.mubr.bf16.gmra.mrb[0].mxu0 %v942
        %v981 = vpop.f32.mrb[0].mxu0
        %v982 = vadd.f32 0.0, %v981
        %v983 = vpop.f32.mrb[0].mxu0
        %v984 = vpop.f32.mrb[0].mxu0
        %v985 = vadd.f32 0.0, %v984
        %v986 = vpop.f32.mrb[0].mxu0
        %987 = vdwg.mxu0
        %v988 = vmul.f32 %v982, 0.35355362
        %v989 = vmul.f32 %v985, 0.35355362
        %v990 = vsel %vm551, %v988, -inf
        %991 = vmax.xlane.f32.xlu0 %v990
        %v992 = vpop.xlane.xlu0 %991
        %v993 = vsel %vm551, %v989, -inf
        %994 = vmax.xlane.f32.xlu0 %v993
        %v995 = vpop.xlane.xlu0 %994
        %v996 = vsub.f32 %v988, %v992
        %v997 = vsub.f32 %v989, %v995
        %v998 = vmul.f32 %v996, 1.442695
        %v999 = vpow.pop %v998
        %v1000 = vmul.f32 %v997, 1.442695
        %v1001 = vpow.pop %v1000
        %v1002 = vsel %vm551, %v999, 0.0
        %1003 = vadd.xlane.f32.xlu0 %v1002
        %v1004 = vpop.xlane.xlu0 %1003
        %v1005 = vsel %vm551, %v1001, 0.0
        %1006 = vadd.xlane.f32.xlu0 %v1005
        %v1007 = vpop.xlane.xlu0 %1006
        %v1008 = vrcp.pop %v1004
        %v1009 = vrcp.pop %v1007
        %v1010 = vmul.f32 %v999, %v1008
        %v1011 = vmul.f32 %v1001, %v1009
        %v1012 = vpack.c.bf16 %v1011, %v1010
        %1013 = vrot.lane.b32.xlu0 %v691, 80
        %v1014 = vpop.permute.xlu0 %1013
        %v1017 = vsel %vm551, %v1012, 0
        %1019 = vmatprep.subr.bf16.mxu0 0
        %1020 = vmatpush1.bf16.msra.mxu0 %v1014
        %1021 = vmatprep.subr.bf16.mxu0 0
        %1022 = vmatpush1.bf16.msra.mxu0 0
        %1023 = vmatprep.subr.bf16.mxu0 0
        %1024 = vmatpush1.bf16.msra.mxu0 0
        %1025 = vmatprep.subr.bf16.mxu0 0
        %1026 = vmatpush1.bf16.msra.mxu0 0
        %1027 = vmatprep.subr.bf16.mxu0 0
        %1028 = vmatpush1.bf16.msra.mxu0 0
        %1029 = vmatprep.subr.bf16.mxu0 0
        %1030 = vmatpush1.bf16.msra.mxu0 0
        %1031 = vmatprep.subr.bf16.mxu0 0
        %1032 = vmatpush1.bf16.msra.mxu0 0
        %1033 = vmatprep.subr.bf16.mxu0 0
        %1034 = vmatpush1.bf16.msra.mxu0 0
        %1035 = vmatprep.subr.bf16.mxu0 0
        %1036 = vmatpush1.bf16.msra.mxu0 0
        %1037 = vmatprep.subr.bf16.mxu0 0
        %1038 = vmatpush1.bf16.msra.mxu0 0
        %1039 = vmatprep.subr.bf16.mxu0 0
        %1040 = vmatpush1.bf16.msra.mxu0 0
        %1041 = vmatprep.subr.bf16.mxu0 0
        %1042 = vmatpush1.bf16.msra.mxu0 0
        %1043 = vmatprep.subr.bf16.mxu0 0
        %1044 = vmatpush1.bf16.msra.mxu0 0
        %1045 = vmatprep.subr.bf16.mxu0 0
        %1046 = vmatpush1.bf16.msra.mxu0 0
        %1047 = vmatprep.subr.bf16.mxu0 0
        %1048 = vmatpush1.bf16.msra.mxu0 0
        %1049 = vmatprep.subr.bf16.mxu0 0
        %1050 = vmatpush1.bf16.msra.mxu0 0
        %1051 = vmatprep.mubr.bf16.mxu0 0
        %1052 = vmatmul.mubr.bf16.gmra.mrb[0].mxu0 %v1017
        %v1053 = vpop.f32.mrb[0].mxu0
        %v1054 = vadd.f32 0.0, %v1053
        %v1055 = vpop.f32.mrb[0].mxu0
        %v1056 = vpop.f32.mrb[0].mxu0
        %v1057 = vadd.f32 0.0, %v1056
        %v1058 = vpop.f32.mrb[0].mxu0
        %1059 = vdwg.mxu0
        %1060 = vrot.lane.b32.xlu0 %v690, 104
        %v1061 = vpop.permute.xlu0 %1060
        %1062 = vrot.lane.b32.xlu0 %v691, 104
        %v1063 = vpop.permute.xlu0 %1062
        %v1065 = vsel %vm692, %v1061, 0
        %v1068 = vsel %vm692, %v1063, 0
        %1070 = vmatprep.subr.bf16.mxu0 0
        %1071 = vmatpush1.bf16.xpose.msra.mxu0 %v1068
        %1072 = vmatprep.subr.bf16.mxu0 0
        %1073 = vmatpush1.bf16.xpose.msra.mxu0 0
        %1074 = vmatprep.subr.bf16.mxu0 0
        %1075 = vmatpush1.bf16.xpose.msra.mxu0 0
        %1076 = vmatprep.subr.bf16.mxu0 0
        %1077 = vmatpush1.bf16.xpose.msra.mxu0 0
        %1078 = vmatprep.subr.bf16.mxu0 0
        %1079 = vmatpush1.bf16.xpose.msra.mxu0 0
        %1080 = vmatprep.subr.bf16.mxu0 0
        %1081 = vmatpush1.bf16.xpose.msra.mxu0 0
        %1082 = vmatprep.subr.bf16.mxu0 0
        %1083 = vmatpush1.bf16.xpose.msra.mxu0 0
        %1084 = vmatprep.subr.bf16.mxu0 0
        %1085 = vmatpush1.bf16.xpose.msra.mxu0 0
        %1086 = vmatprep.subr.bf16.mxu0 0
        %1087 = vmatpush1.bf16.xpose.msra.mxu0 0
        %1088 = vmatprep.subr.bf16.mxu0 0
        %1089 = vmatpush1.bf16.xpose.msra.mxu0 0
        %1090 = vmatprep.subr.bf16.mxu0 0
        %1091 = vmatpush1.bf16.xpose.msra.mxu0 0
        %1092 = vmatprep.subr.bf16.mxu0 0
        %1093 = vmatpush1.bf16.xpose.msra.mxu0 0
        %1094 = vmatprep.subr.bf16.mxu0 0
        %1095 = vmatpush1.bf16.xpose.msra.mxu0 0
        %1096 = vmatprep.subr.bf16.mxu0 0
        %1097 = vmatpush1.bf16.xpose.msra.mxu0 0
        %1098 = vmatprep.subr.bf16.mxu0 0
        %1099 = vmatpush1.bf16.xpose.msra.mxu0 0
        %1100 = vmatprep.subr.bf16.mxu0 0
        %1101 = vmatpush1.bf16.xpose.msra.mxu0 0
        %1102 = vmatprep.mubr.bf16.mxu0 0
        %1103 = vmatmul.mubr.bf16.gmra.mrb[0].mxu0 %v1065
        %v1104 = vpop.f32.mrb[0].mxu0
        %v1105 = vadd.f32 0.0, %v1104
        %v1106 = vpop.f32.mrb[0].mxu0
        %v1107 = vpop.f32.mrb[0].mxu0
        %v1108 = vadd.f32 0.0, %v1107
        %v1109 = vpop.f32.mrb[0].mxu0
        %1110 = vdwg.mxu0
        %v1111 = vmul.f32 %v1105, 0.35355362
        %v1112 = vmul.f32 %v1108, 0.35355362
        %v1113 = vsel %vm551, %v1111, -inf
        %1114 = vmax.xlane.f32.xlu0 %v1113
        %v1115 = vpop.xlane.xlu0 %1114
        %v1116 = vsel %vm551, %v1112, -inf
        %1117 = vmax.xlane.f32.xlu0 %v1116
        %v1118 = vpop.xlane.xlu0 %1117
        %v1119 = vsub.f32 %v1111, %v1115
        %v1120 = vsub.f32 %v1112, %v1118
        %v1121 = vmul.f32 %v1119, 1.442695
        %v1122 = vpow.pop %v1121
        %v1123 = vmul.f32 %v1120, 1.442695
        %v1124 = vpow.pop %v1123
        %v1125 = vsel %vm551, %v1122, 0.0
        %1126 = vadd.xlane.f32.xlu0 %v1125
        %v1127 = vpop.xlane.xlu0 %1126
        %v1128 = vsel %vm551, %v1124, 0.0
        %1129 = vadd.xlane.f32.xlu0 %v1128
        %v1130 = vpop.xlane.xlu0 %1129
        %v1131 = vrcp.pop %v1127
        %v1132 = vrcp.pop %v1130
        %v1133 = vmul.f32 %v1122, %v1131
        %v1134 = vmul.f32 %v1124, %v1132
        %v1135 = vpack.c.bf16 %v1134, %v1133
        %1136 = vrot.lane.b32.xlu0 %v691, 72
        %v1137 = vpop.permute.xlu0 %1136
        %v1140 = vsel %vm551, %v1135, 0
        %1142 = vmatprep.subr.bf16.mxu0 0
        %1143 = vmatpush1.bf16.msra.mxu0 %v1137
        %1144 = vmatprep.subr.bf16.mxu0 0
        %1145 = vmatpush1.bf16.msra.mxu0 0
        %1146 = vmatprep.subr.bf16.mxu0 0
        %1147 = vmatpush1.bf16.msra.mxu0 0
        %1148 = vmatprep.subr.bf16.mxu0 0
        %1149 = vmatpush1.bf16.msra.mxu0 0
        %1150 = vmatprep.subr.bf16.mxu0 0
        %1151 = vmatpush1.bf16.msra.mxu0 0
        %1152 = vmatprep.subr.bf16.mxu0 0
        %1153 = vmatpush1.bf16.msra.mxu0 0
        %1154 = vmatprep.subr.bf16.mxu0 0
        %1155 = vmatpush1.bf16.msra.mxu0 0
        %1156 = vmatprep.subr.bf16.mxu0 0
        %1157 = vmatpush1.bf16.msra.mxu0 0
        %1158 = vmatprep.subr.bf16.mxu0 0
        %1159 = vmatpush1.bf16.msra.mxu0 0
        %1160 = vmatprep.subr.bf16.mxu0 0
        %1161 = vmatpush1.bf16.msra.mxu0 0
        %1162 = vmatprep.subr.bf16.mxu0 0
        %1163 = vmatpush1.bf16.msra.mxu0 0
        %1164 = vmatprep.subr.bf16.mxu0 0
        %1165 = vmatpush1.bf16.msra.mxu0 0
        %1166 = vmatprep.subr.bf16.mxu0 0
        %1167 = vmatpush1.bf16.msra.mxu0 0
        %1168 = vmatprep.subr.bf16.mxu0 0
        %1169 = vmatpush1.bf16.msra.mxu0 0
        %1170 = vmatprep.subr.bf16.mxu0 0
        %1171 = vmatpush1.bf16.msra.mxu0 0
        %1172 = vmatprep.subr.bf16.mxu0 0
        %1173 = vmatpush1.bf16.msra.mxu0 0
        %1174 = vmatprep.mubr.bf16.mxu0 0
        %1175 = vmatmul.mubr.bf16.gmra.mrb[0].mxu0 %v1140
        %v1176 = vpop.f32.mrb[0].mxu0
        %v1177 = vadd.f32 0.0, %v1176
        %v1178 = vpop.f32.mrb[0].mxu0
        %v1179 = vpop.f32.mrb[0].mxu0
        %v1180 = vadd.f32 0.0, %v1179
        %v1181 = vpop.f32.mrb[0].mxu0
        %1182 = vdwg.mxu0
        %1185 = vrot.lane.b32.xlu0 %v931, 8
        %v1186 = vpop.permute.xlu0 %1185
        %1187 = vrot.lane.b32.xlu0 %v934, 8
        %v1188 = vpop.permute.xlu0 %1187
        %1193 = vrot.lane.b32.xlu0 %v1054, 16
        %v1194 = vpop.permute.xlu0 %1193
        %1195 = vrot.lane.b32.xlu0 %v1057, 16
        %v1196 = vpop.permute.xlu0 %1195
        %1201 = vrot.lane.b32.xlu0 %v1177, 24
        %v1202 = vpop.permute.xlu0 %1201
        %1203 = vrot.lane.b32.xlu0 %v1180, 24
        %v1204 = vpop.permute.xlu0 %1203
        %v1207 = vsel %vm692, %v807, %v1186
        %v1208 = vsel %vm692, %v810, %v1188
        %v1209 = vsel %vm551, %v1207, %v1194
        %v1210 = vsel %vm551, %v1208, %v1196
        %vm1211 = vcmask 195584
        %v1212 = vsel %vm1211, %v1209, %v1202
        %v1213 = vsel %vm1211, %v1210, %v1204
        %v1214 = vadd.f32 %v413, %v1212
        %v1215 = vadd.f32 %v414, %v1213
        %v1216 = vld [vmem:[%s6] sm:$0x1]
        %v1217 = vld [vmem:[%s7] sm:$0x1]
        %v1218 = vsel %vm417, %v1214, 0.0
        %1219 = vadd.xlane.f32.xlu0 %v1218
        %v1220 = vpop.xlane.xlu0 %1219
        %v1221 = vsel %vm417, %v1215, 0.0
        %1222 = vadd.xlane.f32.xlu0 %v1221
        %v1223 = vpop.xlane.xlu0 %1222
        %v1224 = vmul.f32 %v1220, %v424
        %v1225 = vmul.f32 %v1223, %v424
        %v1226 = vsub.f32 %v1214, %v1224
        %v1227 = vsub.f32 %v1215, %v1225
        %v1228 = vmul.f32 %v1226, %v1226
        %v1229 = vmul.f32 %v1227, %v1227
        %v1230 = vsel %vm417, %v1228, 0.0
        %1231 = vadd.xlane.f32.xlu0 %v1230
        %v1232 = vpop.xlane.xlu0 %1231
        %v1233 = vsel %vm417, %v1229, 0.0
        %1234 = vadd.xlane.f32.xlu0 %v1233
        %v1235 = vpop.xlane.xlu0 %1234
        %v1236 = vmul.f32 %v1232, %v424
        %v1237 = vmul.f32 %v1235, %v424
        %v1238 = vadd.f32 %v1236, 1e-05
        %v1239 = vadd.f32 %v1237, 1e-05
        %v1240 = vrsqrt.pop %v1238
        %v1241 = vrsqrt.pop %v1239
        %v1242 = vmul.f32 %v1226, %v1240
        %v1243 = vmul.f32 %v1227, %v1241
        %v1245 = vlaneseq
        %v1246 = vshrl.u32 %v1245, 7
        %v1247 = vsub.s32 0, %v1246
        %v1248 = vrot.slane %v1216, %v1247
        %v1250 = vmul.f32 %v1242, %v1248
        %v1251 = vmul.f32 %v1243, %v1248
        %v1253 = vlaneseq
        %v1254 = vshrl.u32 %v1253, 7
        %v1255 = vsub.s32 0, %v1254
        %v1256 = vrot.slane %v1217, %v1255
        %v1258 = vadd.f32 %v1250, %v1256
        %v1259 = vadd.f32 %v1251, %v1256
        %v1260 = vpack.c.bf16 %v1259, %v1258
        %v1261 = vld [vmem:[%s8] sm:$0xff]
        %v1262 = vld [vmem:[%s8 + $0x8] sm:$0xff]
        %v1263 = vld [vmem:[%s8 + $0x10] sm:$0xff]
        %v1264 = vld [vmem:[%s8 + $0x18] sm:$0xff]
        %v1265 = vpack.c.bf16 %v1262, %v1261
        %v1266 = vpack.c.bf16 %v1264, %v1263
        %v1267 = vld [vmem:[%s9] sm:$0x1]
        %v1269 = vlaneseq
        %v1270 = vshrl.u32 %v1269, 7
        %v1271 = vsub.s32 0, %v1270
        %v1272 = vrot.slane %v1267, %v1271
        %v1275 = vsel %vm417, %v1260, 0
        %1277 = vmatprep.subr.bf16.mxu0 0
        %1278 = vmatpush1.bf16.msra.mxu0 %v1265
        %1279 = vmatprep.subr.bf16.mxu0 0
        %1280 = vmatpush1.bf16.msra.mxu0 %v1266
        %1281 = vmatprep.subr.bf16.mxu0 0
        %1282 = vmatpush1.bf16.msra.mxu0 0
        %1283 = vmatprep.subr.bf16.mxu0 0
        %1284 = vmatpush1.bf16.msra.mxu0 0
        %1285 = vmatprep.subr.bf16.mxu0 0
        %1286 = vmatpush1.bf16.msra.mxu0 0
        %1287 = vmatprep.subr.bf16.mxu0 0
        %1288 = vmatpush1.bf16.msra.mxu0 0
        %1289 = vmatprep.subr.bf16.mxu0 0
        %1290 = vmatpush1.bf16.msra.mxu0 0
        %1291 = vmatprep.subr.bf16.mxu0 0
        %1292 = vmatpush1.bf16.msra.mxu0 0
        %1293 = vmatprep.subr.bf16.mxu0 0
        %1294 = vmatpush1.bf16.msra.mxu0 0
        %1295 = vmatprep.subr.bf16.mxu0 0
        %1296 = vmatpush1.bf16.msra.mxu0 0
        %1297 = vmatprep.subr.bf16.mxu0 0
        %1298 = vmatpush1.bf16.msra.mxu0 0
        %1299 = vmatprep.subr.bf16.mxu0 0
        %1300 = vmatpush1.bf16.msra.mxu0 0
        %1301 = vmatprep.subr.bf16.mxu0 0
        %1302 = vmatpush1.bf16.msra.mxu0 0
        %1303 = vmatprep.subr.bf16.mxu0 0
        %1304 = vmatpush1.bf16.msra.mxu0 0
        %1305 = vmatprep.subr.bf16.mxu0 0
        %1306 = vmatpush1.bf16.msra.mxu0 0
        %1307 = vmatprep.subr.bf16.mxu0 0
        %1308 = vmatpush1.bf16.msra.mxu0 0
        %1309 = vmatprep.mubr.bf16.mxu0 0
        %1310 = vmatmul.mubr.bf16.gmra.mrb[0].mxu0 %v1275
        %v1311 = vpop.f32.mrb[0].mxu0
        %v1312 = vadd.f32 %v1272, %v1311
        %v1313 = vpop.f32.mrb[0].mxu0
        %v1314 = vpop.f32.mrb[0].mxu0
        %v1315 = vadd.f32 %v1272, %v1314
        %v1316 = vpop.f32.mrb[0].mxu0
        %1317 = vdwg.mxu0
        %v1318 = vmul.f32 %v1312, 0.5
        %v1319 = vmul.f32 %v1315, 0.5
        %v1320 = vmul.f32 %v1312, 0.044715
        %v1321 = vmul.f32 %v1315, 0.044715
        %v1322 = vmul.f32 %v1320, %v1312
        %v1323 = vmul.f32 %v1321, %v1315
        %v1324 = vmul.f32 %v1322, %v1312
        %v1325 = vmul.f32 %v1323, %v1315
        %v1326 = vadd.f32 %v1312, %v1324
        %v1327 = vadd.f32 %v1315, %v1325
        %v1328 = vmul.f32 %v1326, 0.7978846
        %v1329 = vmul.f32 %v1327, 0.7978846
        %v1330 = vtanh.pop %v1328
        %v1331 = vtanh.pop %v1329
        %v1332 = vadd.f32 %v1330, 1.0
        %v1333 = vadd.f32 %v1331, 1.0
        %v1334 = vmul.f32 %v1318, %v1332
        %v1335 = vmul.f32 %v1319, %v1333
        %v1336 = vpack.c.bf16 %v1335, %v1334
        %v1337 = vld [vmem:[%s10] sm:$0xff]
        %v1338 = vld [vmem:[%s10 + $0x8] sm:$0xff]
        %v1339 = vld [vmem:[%s10 + $0x10] sm:$0xff]
        %v1340 = vld [vmem:[%s10 + $0x18] sm:$0xff]
        %v1341 = vld [vmem:[%s10 + $0x20] sm:$0xff]
        %v1342 = vld [vmem:[%s10 + $0x28] sm:$0xff]
        %v1343 = vld [vmem:[%s10 + $0x30] sm:$0xff]
        %v1344 = vld [vmem:[%s10 + $0x38] sm:$0xff]
        %v1345 = vld [vmem:[%s10 + $0x40] sm:$0xff]
        %v1346 = vld [vmem:[%s10 + $0x48] sm:$0xff]
        %v1347 = vld [vmem:[%s10 + $0x50] sm:$0xff]
        %v1348 = vld [vmem:[%s10 + $0x58] sm:$0xff]
        %v1349 = vld [vmem:[%s10 + $0x60] sm:$0xff]
        %v1350 = vld [vmem:[%s10 + $0x68] sm:$0xff]
        %v1351 = vld [vmem:[%s10 + $0x70] sm:$0xff]
        %v1352 = vld [vmem:[%s10 + $0x78] sm:$0xff]
        %v1353 = vpack.c.bf16 %v1338, %v1337
        %v1354 = vpack.c.bf16 %v1340, %v1339
        %v1355 = vpack.c.bf16 %v1342, %v1341
        %v1356 = vpack.c.bf16 %v1344, %v1343
        %v1357 = vpack.c.bf16 %v1346, %v1345
        %v1358 = vpack.c.bf16 %v1348, %v1347
        %v1359 = vpack.c.bf16 %v1350, %v1349
        %v1360 = vpack.c.bf16 %v1352, %v1351
        %v1361 = vld [vmem:[%s11] sm:$0x1]
        %v1363 = vlaneseq
        %v1364 = vshrl.u32 %v1363, 7
        %v1365 = vsub.s32 0, %v1364
        %v1366 = vrot.slane %v1361, %v1365
        %1368 = vmatprep.subr.bf16.mxu0 0
        %1369 = vmatpush1.bf16.msra.mxu0 %v1353
        %1370 = vmatprep.subr.bf16.mxu0 0
        %1371 = vmatpush1.bf16.msra.mxu0 %v1354
        %1372 = vmatprep.subr.bf16.mxu0 0
        %1373 = vmatpush1.bf16.msra.mxu0 %v1355
        %1374 = vmatprep.subr.bf16.mxu0 0
        %1375 = vmatpush1.bf16.msra.mxu0 %v1356
        %1376 = vmatprep.subr.bf16.mxu0 0
        %1377 = vmatpush1.bf16.msra.mxu0 %v1357
        %1378 = vmatprep.subr.bf16.mxu0 0
        %1379 = vmatpush1.bf16.msra.mxu0 %v1358
        %1380 = vmatprep.subr.bf16.mxu0 0
        %1381 = vmatpush1.bf16.msra.mxu0 %v1359
        %1382 = vmatprep.subr.bf16.mxu0 0
        %1383 = vmatpush1.bf16.msra.mxu0 %v1360
        %1384 = vmatprep.subr.bf16.mxu0 0
        %1385 = vmatpush1.bf16.msra.mxu0 0
        %1386 = vmatprep.subr.bf16.mxu0 0
        %1387 = vmatpush1.bf16.msra.mxu0 0
        %1388 = vmatprep.subr.bf16.mxu0 0
        %1389 = vmatpush1.bf16.msra.mxu0 0
        %1390 = vmatprep.subr.bf16.mxu0 0
        %1391 = vmatpush1.bf16.msra.mxu0 0
        %1392 = vmatprep.subr.bf16.mxu0 0
        %1393 = vmatpush1.bf16.msra.mxu0 0
        %1394 = vmatprep.subr.bf16.mxu0 0
        %1395 = vmatpush1.bf16.msra.mxu0 0
        %1396 = vmatprep.subr.bf16.mxu0 0
        %1397 = vmatpush1.bf16.msra.mxu0 0
        %1398 = vmatprep.subr.bf16.mxu0 0
        %1399 = vmatpush1.bf16.msra.mxu0 0
        %1400 = vmatprep.mubr.bf16.mxu0 0
        %1401 = vmatmul.mubr.bf16.gmra.mrb[0].mxu0 %v1336
        %v1402 = vpop.f32.mrb[0].mxu0
        %v1403 = vadd.f32 %v1366, %v1402
        %v1404 = vpop.f32.mrb[0].mxu0
        %v1405 = vpop.f32.mrb[0].mxu0
        %v1406 = vadd.f32 %v1366, %v1405
        %v1407 = vpop.f32.mrb[0].mxu0
        %1408 = vdwg.mxu0
        %v1409 = vadd.f32 %v1214, %v1403
        %v1410 = vadd.f32 %v1215, %v1406
        %1411 = vst.msk [vmem:[%s406] sm:$0xff] %vm417, %v1409
        %1412 = vst.msk [vmem:[%s406 + $0x8] sm:$0xff] %vm417, %v1410
        %s1413 = sand.u32 %s291, 1
        %s1414 = scalar_lea.sflag [#allocation4], %s1413
        %s1415 = sand.u32 %s291, 1
        %s1416 = smul.addr %s1415, 16
        %s1417 = scalar_lea.vmem [#allocation3], %s1416
        // Predicated region
        $region69: #{tpu_custom_call.1} parent=67 // pred_check
          %p1418 = pneg %p301
        $region70: #{tpu_custom_call.1} parent=67 // pred_check_branch
          %1420 = sbr.rel (%p1418) target = $region72
        $region71: #{tpu_custom_call.1} parent=67 // pred_region
          %s1422 = ssub.s32 256, 256
          %1423 = vsyncadd %s1414, %s1422
          %s1424 = smul.addr %s26, 2
          %s1425 = smul.addr %s1424, 128
          %s1426 = scalar_lea.hbm %s12, %s1425
          %s1427 = sshll.u32 %s1417, 4
          %s1428 = int_to_ptr.vmem [resolvable:$true] %s1427
          %1433 = dma.vmem_to_hbm [thread:$0]  %s1428, 256, %s1426, %s1414, 128, 128, 8
        $region72: #{tpu_custom_call.1} parent=67 // pred_fallthru
          _
      $region68: #{tpu_custom_call.1} parent=5 // pred_fallthru
        _
      %p1434 = scmp.le.s32.totalorder 2, %s21
      // Predicated region
      $region73: #{tpu_custom_call.1} parent=5 // pred_check
        %p1435 = pneg %p1434
      $region74: #{tpu_custom_call.1} parent=5 // pred_check_branch
        %1437 = sbr.rel (%p1435) target = $region76
      $region75: #{tpu_custom_call.1} parent=5 // pred_region
        %s1438 = ssub.s32 %s21, 2
        // Predicated region
        $region77: #{tpu_custom_call.1} parent=75 // pred_check
          %p1439 = pneg %p307
        $region78: #{tpu_custom_call.1} parent=75 // pred_check_branch
          %1441 = sbr.rel (%p1439) target = $region80
        $region79: #{tpu_custom_call.1} parent=75 // pred_region
          %s1442 = sand.u32 %s292, 1
          %s1443 = scalar_lea.sflag [#allocation4], %s1442
          %s1444 = sand.u32 %s292, 1
          %s1445 = smul.addr %s1444, 16
          %s1446 = scalar_lea.vmem [#allocation3], %s1445
          %1447 = dma.done %s1443, 256
        $region80: #{tpu_custom_call.1} parent=75 // pred_fallthru
          _
      $region76: #{tpu_custom_call.1} parent=5 // pred_fallthru
        _
    $region6: #{tpu_custom_call.1} parent=1 // loop_footer
      %s25 = sadd.s32 1, %s21
    $region7: #{tpu_custom_call.1} parent=1 // loop_footer_branch
      %20 = sbr.rel target = $region3
    $region8: #{tpu_custom_call.1} parent=1 // loop_exit
      _
    %1448 = vsyncpa [#allocation4], 1
    %s1449 = scalar_lea.sflag [#allocation4], 1
    %1450 = vsyncpa %s1449, 1

</llo_original>
